<compile_context>
chip_gen: v5e
topology: v5e:2x2
jax: 0.10.0
libtpu: 0.0.40
codegen_flags: <defaults>
</compile_context>

<pallas_src>
import functools
import math

import jax
import jax.numpy as jnp
from jax.experimental import pallas as pl
from jax.experimental.pallas import tpu as pltpu


# ----------------------------- kernel --------------------------------------
def transformer_layer_kernel(
    x_ref,                      # (S, E)  one sequence (batch dim squeezed by BlockSpec)
    ln1_g_ref, ln1_b_ref,       # (1, E) f32
    wq_ref, bq_ref,             # (H, E, Dh) bf16, (H, 1, Dh) f32
    wk_ref, bk_ref,
    wv_ref, bv_ref,
    wo_ref, bo_ref,             # (H, Dh, E) bf16, (1, E) f32
    ln2_g_ref, ln2_b_ref,       # (1, E) f32
    w1_ref, b1_ref,             # (E, F) bf16, (1, F) f32
    w2_ref, b2_ref,             # (F, E) bf16, (1, E) f32
    o_ref,                      # (S, E)
    *, num_heads, head_dim, eps,
):
    f32 = jnp.float32
    bf16 = jnp.bfloat16
    x = x_ref[...].astype(f32)                                    # (S, E)
    S, E = x.shape

    def layer_norm(v, g_ref, b_ref):                              # f32 VPU math
        mu = jnp.mean(v, axis=-1, keepdims=True)
        c = v - mu
        var = jnp.mean(c * c, axis=-1, keepdims=True)
        return c * jax.lax.rsqrt(var + eps) * g_ref[...] + b_ref[...]

    # ---------------- attention block (head-batched) ----------------
    h = layer_norm(x, ln1_g_ref, ln1_b_ref)                       # (S, E) f32
    hb = jnp.broadcast_to(h.astype(bf16)[None, :, :],
                          (num_heads, S, E))                      # (H, S, E) bf16 (cheap leading bcast)

    def head_proj(w_ref, b_ref):
        # (H,S,E) x (H,E,Dh) -> (H,S,Dh), f32 accumulation, f32 bias add
        return jnp.einsum('hse,hed->hsd', hb, w_ref[...],
                          preferred_element_type=f32) + b_ref[...]

    q = head_proj(wq_ref, bq_ref)                                 # (H, S, Dh) f32
    k = head_proj(wk_ref, bk_ref)
    v = head_proj(wv_ref, bv_ref)

    scale = 1.0 / math.sqrt(head_dim)
    s = jnp.einsum('hqd,hkd->hqk', q.astype(bf16), k.astype(bf16),
                   preferred_element_type=f32) * scale            # (H, S, S) f32
    s = s - jnp.max(s, axis=-1, keepdims=True)
    p = jnp.exp(s)
    denom = jnp.sum(p, axis=-1, keepdims=True)
    p = p * pl.reciprocal(denom, approx=True)                     # EUP, frees VALU slots

    ctx = jnp.einsum('hqk,hkd->hqd', p.astype(bf16), v.astype(bf16),
                     preferred_element_type=f32)                  # (H, S, Dh) f32

    # output projection with heads folded in: sum_h ctx_h @ Wo_h  (== concat + proj)
    attn = jnp.einsum('hqd,hde->hqe', ctx.astype(bf16), wo_ref[...],
                      preferred_element_type=f32)                 # (H, S, E) f32
    attn = jnp.sum(attn, axis=0) + bo_ref[...]                    # (S, E) f32

    x1 = x + attn                                                 # residual 1 (f32)

    # ---------------- feed-forward block ----------------
    h2 = layer_norm(x1, ln2_g_ref, ln2_b_ref)
    f1 = jnp.dot(h2.astype(bf16), w1_ref[...],
                 preferred_element_type=f32) + b1_ref[...]        # (S, F) f32
    f1 = jnp.maximum(f1, 0.0)                                     # ReLU (f32)
    y = jnp.dot(f1.astype(bf16), w2_ref[...],
                preferred_element_type=f32) + b2_ref[...]         # (S, E) f32

    o_ref[...] = (x1 + y).astype(o_ref.dtype)                     # residual 2


# ----------------------------- wrapper --------------------------------------
def transformer_layer_forward(x, params, *, num_heads, eps=1e-5):
    """x: [B, S, E]; params: output of prepare_kernel_params."""
    B, S, E = x.shape
    F = params["w1"].shape[1]
    assert E % num_heads == 0
    head_dim = E // num_heads
    H = num_heads

    def rep(shape):  # replicated block (constant index_map) -> stays VMEM-resident
        nz = (0,) * len(shape)
        return pl.BlockSpec(shape, lambda b, _nz=nz: _nz)

    kern = functools.partial(transformer_layer_kernel,
                             num_heads=num_heads, head_dim=head_dim, eps=eps)

    return pl.pallas_call(
        kern,
        out_shape=jax.ShapeDtypeStruct((B, S, E), x.dtype),
        grid_spec=pltpu.PrefetchScalarGridSpec(
            num_scalar_prefetch=0,
            grid=(B,),                                # one full sequence per grid step
            in_specs=[
                pl.BlockSpec((None, S, E), lambda b: (b, 0, 0)),    # x (batch squeezed)
                rep((1, E)), rep((1, E)),                           # ln1 gamma / beta
                rep((H, E, head_dim)), rep((H, 1, head_dim)),       # Wq, bq (per-head)
                rep((H, E, head_dim)), rep((H, 1, head_dim)),       # Wk, bk
                rep((H, E, head_dim)), rep((H, 1, head_dim)),       # Wv, bv
                rep((H, head_dim, E)), rep((1, E)),                 # Wo, bo
                rep((1, E)), rep((1, E)),                           # ln2 gamma / beta
                rep((E, F)), rep((1, F)),                           # W1, b1
                rep((F, E)), rep((1, E)),                           # W2, b2
            ],
            out_specs=pl.BlockSpec((None, S, E), lambda b: (b, 0, 0)),
        ),
        compiler_params=pltpu.CompilerParams(
            dimension_semantics=("parallel",),        # batches split across v7x TCs
            vmem_limit_bytes=32 * 1024 * 1024),
    )(
        x,
        params["ln1_g"], params["ln1_b"],
        params["wq"], params["bq"],
        params["wk"], params["bk"],
        params["wv"], params["bv"],
        params["wo"], params["bo"],
        params["ln2_g"], params["ln2_b"],
        params["w1"], params["b1"],
        params["w2"], params["b2"],
    )


# --------------------- parameter init / prep / reference --------------------
def init_torch_style_params(key, embed_size, ff_size):
    """Deterministic params in torch nn.Linear layout: weight (out, in), bias (out,)."""
    ks = jax.random.split(key, 16)

    def linear_init(kw, kb, out_f, in_f):
        bound = 1.0 / math.sqrt(in_f)
        w = jax.random.uniform(kw, (out_f, in_f), minval=-bound, maxval=bound,
                               dtype=jnp.float32)
        b = jax.random.uniform(kb, (out_f,), minval=-bound, maxval=bound,
                               dtype=jnp.float32)
        return w, b

    wq, bq = linear_init(ks[0], ks[1], embed_size, embed_size)
    wk, bk = linear_init(ks[2], ks[3], embed_size, embed_size)
    wv, bv = linear_init(ks[4], ks[5], embed_size, embed_size)
    wo, bo = linear_init(ks[6], ks[7], embed_size, embed_size)
    w1, b1 = linear_init(ks[8], ks[9], ff_size, embed_size)
    w2, b2 = linear_init(ks[10], ks[11], embed_size, ff_size)
    ln1_g = jax.random.uniform(ks[12], (embed_size,), minval=0.5, maxval=1.5, dtype=jnp.float32)
    ln1_b = jax.random.uniform(ks[13], (embed_size,), minval=-0.1, maxval=0.1, dtype=jnp.float32)
    ln2_g = jax.random.uniform(ks[14], (embed_size,), minval=0.5, maxval=1.5, dtype=jnp.float32)
    ln2_b = jax.random.uniform(ks[15], (embed_size,), minval=-0.1, maxval=0.1, dtype=jnp.float32)
    return dict(wq=wq, bq=bq, wk=wk, bk=bk, wv=wv, bv=bv, wo=wo, bo=bo,
                w1=w1, b1=b1, w2=w2, b2=b2,
                ln1_g=ln1_g, ln1_b=ln1_b, ln2_g=ln2_g, ln2_b=ln2_b)


def prepare_kernel_params(p, num_heads):
    """One-time layout prep (outside the jitted forward):
    - QKV weights (out,in) -> per-head (H, E_in, Dh) bf16; biases -> (H, 1, Dh) f32.
    - Output-proj weight -> (H, Dh, E_out) bf16 (folds the head concat into the matmul).
    - FFN weights -> (in,out) bf16; all biases / LN params -> (1, n) f32 rows.
    """
    E = p["wq"].shape[1]
    Dh = E // num_heads
    bf16 = jnp.bfloat16
    row = lambda v: v.reshape(1, -1)

    def head_w(w):   # (E_out, E_in) -> (H, E_in, Dh), out index = h*Dh + d
        return jnp.transpose(w.T.reshape(E, num_heads, Dh), (1, 0, 2)).astype(bf16)

    def head_b(b):   # (E_out,) -> (H, 1, Dh)
        return b.reshape(num_heads, 1, Dh)

    return dict(
        ln1_g=row(p["ln1_g"]), ln1_b=row(p["ln1_b"]),
        wq=head_w(p["wq"]), bq=head_b(p["bq"]),
        wk=head_w(p["wk"]), bk=head_b(p["bk"]),
        wv=head_w(p["wv"]), bv=head_b(p["bv"]),
        wo=p["wo"].T.reshape(num_heads, Dh, E).astype(bf16), bo=row(p["bo"]),
        ln2_g=row(p["ln2_g"]), ln2_b=row(p["ln2_b"]),
        w1=p["w1"].T.astype(bf16), b1=row(p["b1"]),
        w2=p["w2"].T.astype(bf16), b2=row(p["b2"]),
    )


def reference_forward(x, p, *, num_heads, eps=1e-5):
    """Plain-JAX f32 replica of the PyTorch TransformerLayer (tp=1), torch-layout weights."""
    B, S, E = x.shape
    Dh = E // num_heads
    hp = "highest"

    def ln(v, g, b):
        mu = v.mean(-1, keepdims=True)
        var = ((v - mu) ** 2).mean(-1, keepdims=True)
        return (v - mu) / jnp.sqrt(var + eps) * g + b

    def lin(v, w, b):  # w in (out, in) layout
        return jnp.einsum("bsi,oi->bso", v, w, precision=hp) + b

    h = ln(x, p["ln1_g"], p["ln1_b"])
    q = lin(h, p["wq"], p["bq"]).reshape(B, S, num_heads, Dh).transpose(0, 2, 1, 3)
    k = lin(h, p["wk"], p["bk"]).reshape(B, S, num_heads, Dh).transpose(0, 2, 1, 3)
    v = lin(h, p["wv"], p["bv"]).reshape(B, S, num_heads, Dh).transpose(0, 2, 1, 3)
    s = jnp.einsum("bhqd,bhkd->bhqk", q, k, precision=hp) / math.sqrt(Dh)
    a = jax.nn.softmax(s, axis=-1)
    o = jnp.einsum("bhqk,bhkd->bhqd", a, v, precision=hp)
    o = o.transpose(0, 2, 1, 3).reshape(B, S, E)
    x1 = x + lin(o, p["wo"], p["bo"])
    h2 = ln(x1, p["ln2_g"], p["ln2_b"])
    ff = jnp.maximum(lin(h2, p["w1"], p["b1"]), 0.0)
    ff = lin(ff, p["w2"], p["b2"])
    return x1 + ff


# ----------------------------------- main ------------------------------------
if __name__ == "__main__":
    # Small shapes consistent with the module: embed_size=32, num_heads=4, ff_size=64.
    B, S, E, H, F = 2, 8, 32, 4, 64

    key = jax.random.PRNGKey(0)
    kx, kp = jax.random.split(key)
    x = jax.random.normal(kx, (B, S, E), dtype=jnp.float32)

    torch_params = init_torch_style_params(kp, E, F)
    kernel_params = prepare_kernel_params(torch_params, num_heads=H)   # one-time, outside jit

    fwd = jax.jit(functools.partial(transformer_layer_forward, num_heads=H))
    out = jax.block_until_ready(fwd(x, kernel_params))

    ref = reference_forward(x, torch_params, num_heads=H)
    assert out.shape == (B, S, E)
    # bf16 MXU operands + approx reciprocal => looser tolerance than a pure-f32 check
    # (per review correctness note); structural bugs would produce O(1e-1+) errors.
    max_err = float(jnp.max(jnp.abs(out - ref)))
    assert bool(jnp.all(jnp.isfinite(out))), "non-finite output"
    assert jnp.allclose(out, ref, atol=3e-2, rtol=3e-2), f"mismatch vs reference, max_err={max_err}"

    print("KERNEL_OK")
</pallas_src>

<mosaic_0001>
module attributes {stable_mosaic.version = 11 : i64} {
  func.func @transformer_layer_kernel(%arg0: i32, %arg1: memref<1x8x32xf32, #tpu.memory_space<vmem>>, %arg2: memref<1x32xf32, #tpu.memory_space<vmem>>, %arg3: memref<1x32xf32, #tpu.memory_space<vmem>>, %arg4: memref<4x32x8xbf16, #tpu.memory_space<vmem>>, %arg5: memref<4x1x8xf32, #tpu.memory_space<vmem>>, %arg6: memref<4x32x8xbf16, #tpu.memory_space<vmem>>, %arg7: memref<4x1x8xf32, #tpu.memory_space<vmem>>, %arg8: memref<4x32x8xbf16, #tpu.memory_space<vmem>>, %arg9: memref<4x1x8xf32, #tpu.memory_space<vmem>>, %arg10: memref<4x8x32xbf16, #tpu.memory_space<vmem>>, %arg11: memref<1x32xf32, #tpu.memory_space<vmem>>, %arg12: memref<1x32xf32, #tpu.memory_space<vmem>>, %arg13: memref<1x32xf32, #tpu.memory_space<vmem>>, %arg14: memref<32x64xbf16, #tpu.memory_space<vmem>>, %arg15: memref<1x64xf32, #tpu.memory_space<vmem>>, %arg16: memref<64x32xbf16, #tpu.memory_space<vmem>>, %arg17: memref<1x32xf32, #tpu.memory_space<vmem>>, %arg18: memref<1x8x32xf32, #tpu.memory_space<vmem>>) attributes {dimension_semantics = [#tpu.dimension_semantics<parallel>], iteration_bounds = array<i64: 2>, scalar_prefetch = 0 : i64, scratch_operands = 0 : i64, tpu.core_type = #tpu.core_type<tc>, window_params = [{transform_indices = @transform_0, window_bounds = array<i64: 1, 8, 32>}, {pipeline_mode = #tpu.pipeline_mode<synchronous>, transform_indices = @transform_1, window_bounds = array<i64: 1, 32>}, {pipeline_mode = #tpu.pipeline_mode<synchronous>, transform_indices = @transform_2, window_bounds = array<i64: 1, 32>}, {pipeline_mode = #tpu.pipeline_mode<synchronous>, transform_indices = @transform_3, window_bounds = array<i64: 4, 32, 8>}, {pipeline_mode = #tpu.pipeline_mode<synchronous>, transform_indices = @transform_4, window_bounds = array<i64: 4, 1, 8>}, {pipeline_mode = #tpu.pipeline_mode<synchronous>, transform_indices = @transform_5, window_bounds = array<i64: 4, 32, 8>}, {pipeline_mode = #tpu.pipeline_mode<synchronous>, transform_indices = @transform_6, window_bounds = array<i64: 4, 1, 8>}, {pipeline_mode = #tpu.pipeline_mode<synchronous>, transform_indices = @transform_7, window_bounds = array<i64: 4, 32, 8>}, {pipeline_mode = #tpu.pipeline_mode<synchronous>, transform_indices = @transform_8, window_bounds = array<i64: 4, 1, 8>}, {pipeline_mode = #tpu.pipeline_mode<synchronous>, transform_indices = @transform_9, window_bounds = array<i64: 4, 8, 32>}, {pipeline_mode = #tpu.pipeline_mode<synchronous>, transform_indices = @transform_10, window_bounds = array<i64: 1, 32>}, {pipeline_mode = #tpu.pipeline_mode<synchronous>, transform_indices = @transform_11, window_bounds = array<i64: 1, 32>}, {pipeline_mode = #tpu.pipeline_mode<synchronous>, transform_indices = @transform_12, window_bounds = array<i64: 1, 32>}, {pipeline_mode = #tpu.pipeline_mode<synchronous>, transform_indices = @transform_13, window_bounds = array<i64: 32, 64>}, {pipeline_mode = #tpu.pipeline_mode<synchronous>, transform_indices = @transform_14, window_bounds = array<i64: 1, 64>}, {pipeline_mode = #tpu.pipeline_mode<synchronous>, transform_indices = @transform_15, window_bounds = array<i64: 64, 32>}, {pipeline_mode = #tpu.pipeline_mode<synchronous>, transform_indices = @transform_16, window_bounds = array<i64: 1, 32>}, {transform_indices = @transform_17, window_bounds = array<i64: 1, 8, 32>}]} {
    %c0 = arith.constant 0 : index
    %c0_0 = arith.constant 0 : index
    %c0_1 = arith.constant 0 : index
    %0 = vector.load %arg1[%c0, %c0_0, %c0_1] : memref<1x8x32xf32, #tpu.memory_space<vmem>>, vector<1x8x32xf32>
    %1 = vector.shape_cast %0 : vector<1x8x32xf32> to vector<8x32xf32>
    %cst = arith.constant dense<0.000000e+00> : vector<8xf32>
    %2 = vector.multi_reduction <add>, %1, %cst [1] : vector<8x32xf32> to vector<8xf32>
    %3 = vector.shape_cast %2 : vector<8xf32> to vector<8x1xf32>
    %cst_2 = arith.constant 3.200000e+01 : f32
    %4 = vector.broadcast %cst_2 : f32 to vector<8x1xf32>
    %5 = arith.divf %3, %4 : vector<8x1xf32>
    %6 = vector.broadcast %5 : vector<8x1xf32> to vector<8x32xf32>
    %7 = arith.subf %1, %6 : vector<8x32xf32>
    %8 = arith.mulf %7, %7 : vector<8x32xf32>
    %cst_3 = arith.constant dense<0.000000e+00> : vector<8xf32>
    %9 = vector.multi_reduction <add>, %8, %cst_3 [1] : vector<8x32xf32> to vector<8xf32>
    %10 = vector.shape_cast %9 : vector<8xf32> to vector<8x1xf32>
    %cst_4 = arith.constant 3.200000e+01 : f32
    %11 = vector.broadcast %cst_4 : f32 to vector<8x1xf32>
    %12 = arith.divf %10, %11 : vector<8x1xf32>
    %cst_5 = arith.constant 9.99999974E-6 : f32
    %13 = vector.broadcast %cst_5 : f32 to vector<8x1xf32>
    %14 = arith.addf %12, %13 : vector<8x1xf32>
    %15 = math.rsqrt %14 : vector<8x1xf32>
    %16 = vector.broadcast %15 : vector<8x1xf32> to vector<8x32xf32>
    %17 = arith.mulf %7, %16 : vector<8x32xf32>
    %c0_6 = arith.constant 0 : index
    %c0_7 = arith.constant 0 : index
    %18 = vector.load %arg2[%c0_6, %c0_7] : memref<1x32xf32, #tpu.memory_space<vmem>>, vector<1x32xf32>
    %19 = vector.broadcast %18 : vector<1x32xf32> to vector<8x32xf32>
    %20 = arith.mulf %17, %19 : vector<8x32xf32>
    %c0_8 = arith.constant 0 : index
    %c0_9 = arith.constant 0 : index
    %21 = vector.load %arg3[%c0_8, %c0_9] : memref<1x32xf32, #tpu.memory_space<vmem>>, vector<1x32xf32>
    %22 = vector.broadcast %21 : vector<1x32xf32> to vector<8x32xf32>
    %23 = arith.addf %20, %22 : vector<8x32xf32>
    %24 = arith.truncf %23 : vector<8x32xf32> to vector<8x32xbf16>
    %25 = vector.shape_cast %24 : vector<8x32xbf16> to vector<1x8x32xbf16>
    %26 = vector.shape_cast %25 : vector<1x8x32xbf16> to vector<1x8x32xbf16>
    %27 = vector.broadcast %26 : vector<1x8x32xbf16> to vector<4x8x32xbf16>
    %c0_10 = arith.constant 0 : index
    %c0_11 = arith.constant 0 : index
    %c0_12 = arith.constant 0 : index
    %28 = vector.load %arg4[%c0_10, %c0_11, %c0_12] : memref<4x32x8xbf16, #tpu.memory_space<vmem>>, vector<4x32x8xbf16>
    "tpu.trace_start"() <{level = 10 : i32, message = "hse,hed->hsd"}> : () -> ()
    %cst_13 = arith.constant dense<0.000000e+00> : vector<4x8x8xf32>
    %29 = tpu.matmul %27, %28, %cst_13 {dimension_numbers = #tpu.dot_dimension_numbers<[2], [1], [1], [2], [0, 0, 0, 1, 1, 2], [0], [0]>} : vector<4x8x32xbf16>, vector<4x32x8xbf16>, vector<4x8x8xf32> -> vector<4x8x8xf32>
    "tpu.trace_stop"() : () -> ()
    %c0_14 = arith.constant 0 : index
    %c0_15 = arith.constant 0 : index
    %c0_16 = arith.constant 0 : index
    %30 = vector.load %arg5[%c0_14, %c0_15, %c0_16] : memref<4x1x8xf32, #tpu.memory_space<vmem>>, vector<4x1x8xf32>
    %31 = vector.broadcast %30 : vector<4x1x8xf32> to vector<4x8x8xf32>
    %32 = arith.addf %29, %31 : vector<4x8x8xf32>
    %c0_17 = arith.constant 0 : index
    %c0_18 = arith.constant 0 : index
    %c0_19 = arith.constant 0 : index
    %33 = vector.load %arg6[%c0_17, %c0_18, %c0_19] : memref<4x32x8xbf16, #tpu.memory_space<vmem>>, vector<4x32x8xbf16>
    "tpu.trace_start"() <{level = 10 : i32, message = "hse,hed->hsd"}> : () -> ()
    %cst_20 = arith.constant dense<0.000000e+00> : vector<4x8x8xf32>
    %34 = tpu.matmul %27, %33, %cst_20 {dimension_numbers = #tpu.dot_dimension_numbers<[2], [1], [1], [2], [0, 0, 0, 1, 1, 2], [0], [0]>} : vector<4x8x32xbf16>, vector<4x32x8xbf16>, vector<4x8x8xf32> -> vector<4x8x8xf32>
    "tpu.trace_stop"() : () -> ()
    %c0_21 = arith.constant 0 : index
    %c0_22 = arith.constant 0 : index
    %c0_23 = arith.constant 0 : index
    %35 = vector.load %arg7[%c0_21, %c0_22, %c0_23] : memref<4x1x8xf32, #tpu.memory_space<vmem>>, vector<4x1x8xf32>
    %36 = vector.broadcast %35 : vector<4x1x8xf32> to vector<4x8x8xf32>
    %37 = arith.addf %34, %36 : vector<4x8x8xf32>
    %c0_24 = arith.constant 0 : index
    %c0_25 = arith.constant 0 : index
    %c0_26 = arith.constant 0 : index
    %38 = vector.load %arg8[%c0_24, %c0_25, %c0_26] : memref<4x32x8xbf16, #tpu.memory_space<vmem>>, vector<4x32x8xbf16>
    "tpu.trace_start"() <{level = 10 : i32, message = "hse,hed->hsd"}> : () -> ()
    %cst_27 = arith.constant dense<0.000000e+00> : vector<4x8x8xf32>
    %39 = tpu.matmul %27, %38, %cst_27 {dimension_numbers = #tpu.dot_dimension_numbers<[2], [1], [1], [2], [0, 0, 0, 1, 1, 2], [0], [0]>} : vector<4x8x32xbf16>, vector<4x32x8xbf16>, vector<4x8x8xf32> -> vector<4x8x8xf32>
    "tpu.trace_stop"() : () -> ()
    %c0_28 = arith.constant 0 : index
    %c0_29 = arith.constant 0 : index
    %c0_30 = arith.constant 0 : index
    %40 = vector.load %arg9[%c0_28, %c0_29, %c0_30] : memref<4x1x8xf32, #tpu.memory_space<vmem>>, vector<4x1x8xf32>
    %41 = vector.broadcast %40 : vector<4x1x8xf32> to vector<4x8x8xf32>
    %42 = arith.addf %39, %41 : vector<4x8x8xf32>
    %43 = arith.truncf %32 : vector<4x8x8xf32> to vector<4x8x8xbf16>
    %44 = arith.truncf %37 : vector<4x8x8xf32> to vector<4x8x8xbf16>
    "tpu.trace_start"() <{level = 10 : i32, message = "hqd,hkd->hqk"}> : () -> ()
    %cst_31 = arith.constant dense<0.000000e+00> : vector<4x8x8xf32>
    %45 = tpu.matmul %43, %44, %cst_31 {dimension_numbers = #tpu.dot_dimension_numbers<[2], [2], [1], [1], [0, 0, 0, 1, 1, 1], [0], [0]>} : vector<4x8x8xbf16>, vector<4x8x8xbf16>, vector<4x8x8xf32> -> vector<4x8x8xf32>
    "tpu.trace_stop"() : () -> ()
    %cst_32 = arith.constant 0.353553385 : f32
    %46 = vector.broadcast %cst_32 : f32 to vector<4x8x8xf32>
    %47 = arith.mulf %45, %46 : vector<4x8x8xf32>
    %cst_33 = arith.constant dense<0xFF800000> : vector<4x8xf32>
    %48 = vector.multi_reduction <maximumf>, %47, %cst_33 [2] : vector<4x8x8xf32> to vector<4x8xf32>
    %49 = vector.shape_cast %48 : vector<4x8xf32> to vector<4x8x1xf32>
    %50 = vector.broadcast %49 : vector<4x8x1xf32> to vector<4x8x8xf32>
    %51 = arith.subf %47, %50 : vector<4x8x8xf32>
    %52 = math.exp %51 : vector<4x8x8xf32>
    %cst_34 = arith.constant dense<0.000000e+00> : vector<4x8xf32>
    %53 = vector.multi_reduction <add>, %52, %cst_34 [2] : vector<4x8x8xf32> to vector<4x8xf32>
    %54 = vector.shape_cast %53 : vector<4x8xf32> to vector<4x8x1xf32>
    %55 = tpu.reciprocal %54 {approx = true} : vector<4x8x1xf32> -> vector<4x8x1xf32>
    %56 = vector.broadcast %55 : vector<4x8x1xf32> to vector<4x8x8xf32>
    %57 = arith.mulf %52, %56 : vector<4x8x8xf32>
    %58 = arith.truncf %57 : vector<4x8x8xf32> to vector<4x8x8xbf16>
    %59 = arith.truncf %42 : vector<4x8x8xf32> to vector<4x8x8xbf16>
    "tpu.trace_start"() <{level = 10 : i32, message = "hqk,hkd->hqd"}> : () -> ()
    %cst_35 = arith.constant dense<0.000000e+00> : vector<4x8x8xf32>
    %60 = tpu.matmul %58, %59, %cst_35 {dimension_numbers = #tpu.dot_dimension_numbers<[2], [1], [1], [2], [0, 0, 0, 1, 1, 2], [0], [0]>} : vector<4x8x8xbf16>, vector<4x8x8xbf16>, vector<4x8x8xf32> -> vector<4x8x8xf32>
    "tpu.trace_stop"() : () -> ()
    %61 = arith.truncf %60 : vector<4x8x8xf32> to vector<4x8x8xbf16>
    %c0_36 = arith.constant 0 : index
    %c0_37 = arith.constant 0 : index
    %c0_38 = arith.constant 0 : index
    %62 = vector.load %arg10[%c0_36, %c0_37, %c0_38] : memref<4x8x32xbf16, #tpu.memory_space<vmem>>, vector<4x8x32xbf16>
    "tpu.trace_start"() <{level = 10 : i32, message = "hqd,hde->hqe"}> : () -> ()
    %cst_39 = arith.constant dense<0.000000e+00> : vector<4x8x32xf32>
    %63 = tpu.matmul %61, %62, %cst_39 {dimension_numbers = #tpu.dot_dimension_numbers<[2], [1], [1], [2], [0, 0, 0, 1, 1, 2], [0], [0]>} : vector<4x8x8xbf16>, vector<4x8x32xbf16>, vector<4x8x32xf32> -> vector<4x8x32xf32>
    "tpu.trace_stop"() : () -> ()
    %cst_40 = arith.constant dense<0.000000e+00> : vector<8x32xf32>
    %64 = vector.multi_reduction <add>, %63, %cst_40 [0] : vector<4x8x32xf32> to vector<8x32xf32>
    %c0_41 = arith.constant 0 : index
    %c0_42 = arith.constant 0 : index
    %65 = vector.load %arg11[%c0_41, %c0_42] : memref<1x32xf32, #tpu.memory_space<vmem>>, vector<1x32xf32>
    %66 = vector.broadcast %65 : vector<1x32xf32> to vector<8x32xf32>
    %67 = arith.addf %64, %66 : vector<8x32xf32>
    %68 = arith.addf %1, %67 : vector<8x32xf32>
    %cst_43 = arith.constant dense<0.000000e+00> : vector<8xf32>
    %69 = vector.multi_reduction <add>, %68, %cst_43 [1] : vector<8x32xf32> to vector<8xf32>
    %70 = vector.shape_cast %69 : vector<8xf32> to vector<8x1xf32>
    %cst_44 = arith.constant 3.200000e+01 : f32
    %71 = vector.broadcast %cst_44 : f32 to vector<8x1xf32>
    %72 = arith.divf %70, %71 : vector<8x1xf32>
    %73 = vector.broadcast %72 : vector<8x1xf32> to vector<8x32xf32>
    %74 = arith.subf %68, %73 : vector<8x32xf32>
    %75 = arith.mulf %74, %74 : vector<8x32xf32>
    %cst_45 = arith.constant dense<0.000000e+00> : vector<8xf32>
    %76 = vector.multi_reduction <add>, %75, %cst_45 [1] : vector<8x32xf32> to vector<8xf32>
    %77 = vector.shape_cast %76 : vector<8xf32> to vector<8x1xf32>
    %cst_46 = arith.constant 3.200000e+01 : f32
    %78 = vector.broadcast %cst_46 : f32 to vector<8x1xf32>
    %79 = arith.divf %77, %78 : vector<8x1xf32>
    %cst_47 = arith.constant 9.99999974E-6 : f32
    %80 = vector.broadcast %cst_47 : f32 to vector<8x1xf32>
    %81 = arith.addf %79, %80 : vector<8x1xf32>
    %82 = math.rsqrt %81 : vector<8x1xf32>
    %83 = vector.broadcast %82 : vector<8x1xf32> to vector<8x32xf32>
    %84 = arith.mulf %74, %83 : vector<8x32xf32>
    %c0_48 = arith.constant 0 : index
    %c0_49 = arith.constant 0 : index
    %85 = vector.load %arg12[%c0_48, %c0_49] : memref<1x32xf32, #tpu.memory_space<vmem>>, vector<1x32xf32>
    %86 = vector.broadcast %85 : vector<1x32xf32> to vector<8x32xf32>
    %87 = arith.mulf %84, %86 : vector<8x32xf32>
    %c0_50 = arith.constant 0 : index
    %c0_51 = arith.constant 0 : index
    %88 = vector.load %arg13[%c0_50, %c0_51] : memref<1x32xf32, #tpu.memory_space<vmem>>, vector<1x32xf32>
    %89 = vector.broadcast %88 : vector<1x32xf32> to vector<8x32xf32>
    %90 = arith.addf %87, %89 : vector<8x32xf32>
    %91 = arith.truncf %90 : vector<8x32xf32> to vector<8x32xbf16>
    %c0_52 = arith.constant 0 : index
    %c0_53 = arith.constant 0 : index
    %92 = vector.load %arg14[%c0_52, %c0_53] : memref<32x64xbf16, #tpu.memory_space<vmem>>, vector<32x64xbf16>
    %cst_54 = arith.constant dense<0.000000e+00> : vector<8x64xf32>
    %93 = tpu.matmul %91, %92, %cst_54 {dimension_numbers = #tpu.dot_dimension_numbers<[1], [0], [0], [1], [0, 0, 1, 1], [], []>} : vector<8x32xbf16>, vector<32x64xbf16>, vector<8x64xf32> -> vector<8x64xf32>
    %c0_55 = arith.constant 0 : index
    %c0_56 = arith.constant 0 : index
    %94 = vector.load %arg15[%c0_55, %c0_56] : memref<1x64xf32, #tpu.memory_space<vmem>>, vector<1x64xf32>
    %95 = vector.broadcast %94 : vector<1x64xf32> to vector<8x64xf32>
    %96 = arith.addf %93, %95 : vector<8x64xf32>
    %cst_57 = arith.constant 0.000000e+00 : f32
    %97 = vector.broadcast %cst_57 : f32 to vector<8x64xf32>
    %98 = arith.maximumf %96, %97 : vector<8x64xf32>
    %99 = arith.truncf %98 : vector<8x64xf32> to vector<8x64xbf16>
    %c0_58 = arith.constant 0 : index
    %c0_59 = arith.constant 0 : index
    %100 = vector.load %arg16[%c0_58, %c0_59] : memref<64x32xbf16, #tpu.memory_space<vmem>>, vector<64x32xbf16>
    %cst_60 = arith.constant dense<0.000000e+00> : vector<8x32xf32>
    %101 = tpu.matmul %99, %100, %cst_60 {dimension_numbers = #tpu.dot_dimension_numbers<[1], [0], [0], [1], [0, 0, 1, 1], [], []>} : vector<8x64xbf16>, vector<64x32xbf16>, vector<8x32xf32> -> vector<8x32xf32>
    %c0_61 = arith.constant 0 : index
    %c0_62 = arith.constant 0 : index
    %102 = vector.load %arg17[%c0_61, %c0_62] : memref<1x32xf32, #tpu.memory_space<vmem>>, vector<1x32xf32>
    %103 = vector.broadcast %102 : vector<1x32xf32> to vector<8x32xf32>
    %104 = arith.addf %101, %103 : vector<8x32xf32>
    %105 = arith.addf %68, %104 : vector<8x32xf32>
    %c0_63 = arith.constant 0 : index
    %c0_64 = arith.constant 0 : index
    %c0_65 = arith.constant 0 : index
    %106 = vector.load %arg18[%c0_63, %c0_64, %c0_65] : memref<1x8x32xf32, #tpu.memory_space<vmem>>, vector<1x8x32xf32>
    %107 = vector.shape_cast %106 : vector<1x8x32xf32> to vector<8x32xf32>
    %108 = vector.shape_cast %105 : vector<8x32xf32> to vector<1x8x32xf32>
    tpu.vector_store %arg18[%c0_63, %c0_64, %c0_65], %108 {strides = array<i32>} : memref<1x8x32xf32, #tpu.memory_space<vmem>>, vector<1x8x32xf32>,
    return
  }
  func.func @transform_0(%arg0: i32) -> (i32, i32, i32) {
    %c0_i32 = arith.constant 0 : i32
    %c0_i32_0 = arith.constant 0 : i32
    %c0_i32_1 = arith.constant 0 : i32
    return %arg0, %c0_i32, %c0_i32_0 : i32, i32, i32
  }
  func.func @transform_1(%arg0: i32) -> (i32, i32) {
    %c0_i32 = arith.constant 0 : i32
    %c0_i32_0 = arith.constant 0 : i32
    %c0_i32_1 = arith.constant 0 : i32
    return %c0_i32, %c0_i32_0 : i32, i32
  }
  func.func @transform_2(%arg0: i32) -> (i32, i32) {
    %c0_i32 = arith.constant 0 : i32
    %c0_i32_0 = arith.constant 0 : i32
    %c0_i32_1 = arith.constant 0 : i32
    return %c0_i32, %c0_i32_0 : i32, i32
  }
  func.func @transform_3(%arg0: i32) -> (i32, i32, i32) {
    %c0_i32 = arith.constant 0 : i32
    %c0_i32_0 = arith.constant 0 : i32
    %c0_i32_1 = arith.constant 0 : i32
    %c0_i32_2 = arith.constant 0 : i32
    return %c0_i32, %c0_i32_0, %c0_i32_1 : i32, i32, i32
  }
  func.func @transform_4(%arg0: i32) -> (i32, i32, i32) {
    %c0_i32 = arith.constant 0 : i32
    %c0_i32_0 = arith.constant 0 : i32
    %c0_i32_1 = arith.constant 0 : i32
    %c0_i32_2 = arith.constant 0 : i32
    return %c0_i32, %c0_i32_0, %c0_i32_1 : i32, i32, i32
  }
  func.func @transform_5(%arg0: i32) -> (i32, i32, i32) {
    %c0_i32 = arith.constant 0 : i32
    %c0_i32_0 = arith.constant 0 : i32
    %c0_i32_1 = arith.constant 0 : i32
    %c0_i32_2 = arith.constant 0 : i32
    return %c0_i32, %c0_i32_0, %c0_i32_1 : i32, i32, i32
  }
  func.func @transform_6(%arg0: i32) -> (i32, i32, i32) {
    %c0_i32 = arith.constant 0 : i32
    %c0_i32_0 = arith.constant 0 : i32
    %c0_i32_1 = arith.constant 0 : i32
    %c0_i32_2 = arith.constant 0 : i32
    return %c0_i32, %c0_i32_0, %c0_i32_1 : i32, i32, i32
  }
  func.func @transform_7(%arg0: i32) -> (i32, i32, i32) {
    %c0_i32 = arith.constant 0 : i32
    %c0_i32_0 = arith.constant 0 : i32
    %c0_i32_1 = arith.constant 0 : i32
    %c0_i32_2 = arith.constant 0 : i32
    return %c0_i32, %c0_i32_0, %c0_i32_1 : i32, i32, i32
  }
  func.func @transform_8(%arg0: i32) -> (i32, i32, i32) {
    %c0_i32 = arith.constant 0 : i32
    %c0_i32_0 = arith.constant 0 : i32
    %c0_i32_1 = arith.constant 0 : i32
    %c0_i32_2 = arith.constant 0 : i32
    return %c0_i32, %c0_i32_0, %c0_i32_1 : i32, i32, i32
  }
  func.func @transform_9(%arg0: i32) -> (i32, i32, i32) {
    %c0_i32 = arith.constant 0 : i32
    %c0_i32_0 = arith.constant 0 : i32
    %c0_i32_1 = arith.constant 0 : i32
    %c0_i32_2 = arith.constant 0 : i32
    return %c0_i32, %c0_i32_0, %c0_i32_1 : i32, i32, i32
  }
  func.func @transform_10(%arg0: i32) -> (i32, i32) {
    %c0_i32 = arith.constant 0 : i32
    %c0_i32_0 = arith.constant 0 : i32
    %c0_i32_1 = arith.constant 0 : i32
    return %c0_i32, %c0_i32_0 : i32, i32
  }
  func.func @transform_11(%arg0: i32) -> (i32, i32) {
    %c0_i32 = arith.constant 0 : i32
    %c0_i32_0 = arith.constant 0 : i32
    %c0_i32_1 = arith.constant 0 : i32
    return %c0_i32, %c0_i32_0 : i32, i32
  }
  func.func @transform_12(%arg0: i32) -> (i32, i32) {
    %c0_i32 = arith.constant 0 : i32
    %c0_i32_0 = arith.constant 0 : i32
    %c0_i32_1 = arith.constant 0 : i32
    return %c0_i32, %c0_i32_0 : i32, i32
  }
  func.func @transform_13(%arg0: i32) -> (i32, i32) {
    %c0_i32 = arith.constant 0 : i32
    %c0_i32_0 = arith.constant 0 : i32
    %c0_i32_1 = arith.constant 0 : i32
    return %c0_i32, %c0_i32_0 : i32, i32
  }
  func.func @transform_14(%arg0: i32) -> (i32, i32) {
    %c0_i32 = arith.constant 0 : i32
    %c0_i32_0 = arith.constant 0 : i32
    %c0_i32_1 = arith.constant 0 : i32
    return %c0_i32, %c0_i32_0 : i32, i32
  }
  func.func @transform_15(%arg0: i32) -> (i32, i32) {
    %c0_i32 = arith.constant 0 : i32
    %c0_i32_0 = arith.constant 0 : i32
    %c0_i32_1 = arith.constant 0 : i32
    return %c0_i32, %c0_i32_0 : i32, i32
  }
  func.func @transform_16(%arg0: i32) -> (i32, i32) {
    %c0_i32 = arith.constant 0 : i32
    %c0_i32_0 = arith.constant 0 : i32
    %c0_i32_1 = arith.constant 0 : i32
    return %c0_i32, %c0_i32_0 : i32, i32
  }
  func.func @transform_17(%arg0: i32) -> (i32, i32, i32) {
    %c0_i32 = arith.constant 0 : i32
    %c0_i32_0 = arith.constant 0 : i32
    %c0_i32_1 = arith.constant 0 : i32
    return %arg0, %c0_i32, %c0_i32_0 : i32, i32, i32
  }
}

</mosaic_0001>

<llo_original>
// kernel: transformer_layer_forward.1
$region0: #{transformer_layer_forward.1}
  #allocation0 [shape = 'u32[]', space=smem, size = 0x4, offset = 0x4, fixed_abs, tag = 'smem constant byte address 0x4 - core index']
  #allocation1 [shape = 'u32[72,128]{1,0:T(1,128)}', space=vmem, size = 0x9000, scoped, tag = 'internal scratch']
  %s0 = inlined_call_operand.vmem [shape: f32[2,8,32], index: 0, kind: input, shape index: {}]
  %s1 = inlined_call_operand.vmem [shape: f32[1,32], index: 1, kind: input, shape index: {}]
  %s2 = inlined_call_operand.vmem [shape: f32[1,32], index: 2, kind: input, shape index: {}]
  %s3 = inlined_call_operand.vmem [shape: bf16[4,32,8], index: 3, kind: input, shape index: {}]
  %s4 = inlined_call_operand.vmem [shape: f32[4,1,8], index: 4, kind: input, shape index: {}]
  %s5 = inlined_call_operand.vmem [shape: bf16[4,32,8], index: 5, kind: input, shape index: {}]
  %s6 = inlined_call_operand.vmem [shape: f32[4,1,8], index: 6, kind: input, shape index: {}]
  %s7 = inlined_call_operand.vmem [shape: bf16[4,32,8], index: 7, kind: input, shape index: {}]
  %s8 = inlined_call_operand.vmem [shape: f32[4,1,8], index: 8, kind: input, shape index: {}]
  %s9 = inlined_call_operand.vmem [shape: bf16[4,8,32], index: 9, kind: input, shape index: {}]
  %s10 = inlined_call_operand.vmem [shape: f32[1,32], index: 10, kind: input, shape index: {}]
  %s11 = inlined_call_operand.vmem [shape: f32[1,32], index: 11, kind: input, shape index: {}]
  %s12 = inlined_call_operand.vmem [shape: f32[1,32], index: 12, kind: input, shape index: {}]
  %s13 = inlined_call_operand.vmem [shape: bf16[32,64], index: 13, kind: input, shape index: {}]
  %s14 = inlined_call_operand.vmem [shape: f32[1,64], index: 14, kind: input, shape index: {}]
  %s15 = inlined_call_operand.vmem [shape: bf16[64,32], index: 15, kind: input, shape index: {}]
  %s16 = inlined_call_operand.vmem [shape: f32[1,32], index: 16, kind: input, shape index: {}]
  %s17 = inlined_call_operand.hbm [shape: f32[2,8,32], index: 17, kind: output, shape index: {}]
  %s18 = sld [smem:[#allocation0]]
  $region101: #{transformer_layer_forward.1} parent=0
    _
  %s20 = ssub.s32 1, %s18
  %s21 = scalar_select 0, %s20, %s18
  $region1: #{transformer_layer_forward.1} parent=0
    #allocation2 [shape = 'u8[8192]{0}', space=vmem, size = 0x2000, scoped, tag = 'output window, operand 0']
    #allocation3 [shape = 's32[2]{0}', space=sflag, size = 0x8, scoped, tag = 'scoped memory for transformer_layer_forward.1']
    %22 = vsyncpa [#allocation3], 0
    %s23 = scalar_lea.sflag [#allocation3], 1
    %24 = vsyncpa %s23, 0
    loop: start=0, step=1, limit=4
    $region2: #{transformer_layer_forward.1} parent=1 // loop_pre_header
      _
    $region3: #{transformer_layer_forward.1} parent=1 // loop_header
      %s26 = sphi 0, %s30
      %p27 = scmp.ge.s32.totalorder %s26, 4
      %s36 = sphi 0, %s38
      %s39 = sphi 0, %s36
      %s40 = sphi 0, %s39
      %s56 = sphi 0, %s40
      %s60 = sphi 0, %s60
      %s62 = sphi 0, %s60
      %s63 = sphi 0, %s62
      %s77 = sphi 0, %s63
      %s81 = sphi 0, %s81
      %s83 = sphi 0, %s81
      %s84 = sphi 0, %s83
      %s98 = sphi 0, %s84
      %s102 = sphi 0, %s102
      %s104 = sphi 0, %s102
      %s105 = sphi 0, %s104
      %s119 = sphi 0, %s105
      %s123 = sphi 0, %s123
      %s125 = sphi 0, %s123
      %s126 = sphi 0, %s125
      %s140 = sphi 0, %s126
      %s144 = sphi 0, %s144
      %s146 = sphi 0, %s144
      %s147 = sphi 0, %s146
      %s161 = sphi 0, %s147
      %s165 = sphi 0, %s165
      %s167 = sphi 0, %s165
      %s168 = sphi 0, %s167
      %s182 = sphi 0, %s168
      %s186 = sphi 0, %s186
      %s188 = sphi 0, %s186
      %s189 = sphi 0, %s188
      %s203 = sphi 0, %s189
      %s207 = sphi 0, %s207
      %s209 = sphi 0, %s207
      %s210 = sphi 0, %s209
      %s224 = sphi 0, %s210
      %s228 = sphi 0, %s228
      %s230 = sphi 0, %s228
      %s231 = sphi 0, %s230
      %s245 = sphi 0, %s231
      %s249 = sphi 0, %s249
      %s251 = sphi 0, %s249
      %s252 = sphi 0, %s251
      %s266 = sphi 0, %s252
      %s270 = sphi 0, %s270
      %s272 = sphi 0, %s270
      %s273 = sphi 0, %s272
      %s287 = sphi 0, %s273
      %s291 = sphi 0, %s291
      %s293 = sphi 0, %s291
      %s294 = sphi 0, %s293
      %s308 = sphi 0, %s294
      %s312 = sphi 0, %s312
      %s314 = sphi 0, %s312
      %s315 = sphi 0, %s314
      %s329 = sphi 0, %s315
      %s333 = sphi 0, %s333
      %s335 = sphi 0, %s333
      %s336 = sphi 0, %s335
      %s350 = sphi 0, %s336
      %s354 = sphi 0, %s354
      %s356 = sphi 0, %s354
      %s357 = sphi 0, %s356
      %s371 = sphi 0, %s357
      %s375 = sphi 0, %s375
      %s377 = sphi 0, %s375
      %s378 = sphi 0, %s377
      %s392 = sphi 0, %s378
      %s398 = sphi 0, %s400
      %s401 = sphi 0, %s398
      %s402 = sphi 0, %s401
      %s418 = sphi 0, %s402
    $region4: #{transformer_layer_forward.1} parent=1 // loop_header_branch
      %29 = sbr.rel (%p27) target = $region8
    $region5: #{transformer_layer_forward.1} parent=1 // loop_body
      %s31 = ssub.s32 %s26, 1
      %s32 = ssub.s32 %s26, 2
      %s33 = sadd.s32 %s26, 1
      %s34 = ssub.s32 %s26, %s33
      %p35 = scmp.eq.s32.totalorder %s34, 0
      %s37 = sadd.s32 %s36, 1
      %s38 = scalar_select %p35, %s36, %s37
      %p41 = pneg %p35
      %p42 = scmp.eq.s32.totalorder %s26, 1
      %p43 = por %p41, %p42
      %p44 = scmp.ne.s32.totalorder %s36, %s39
      %p45 = scmp.eq.s32.totalorder %s26, 0
      %p46 = por %p44, %p45
      %p47 = scmp.ne.s32.totalorder %s36, %s39
      %p48 = scmp.eq.s32.totalorder %s31, 1
      %p49 = por %p47, %p48
      %p50 = scmp.ne.s32.totalorder %s39, %s40
      %p51 = scmp.eq.s32.totalorder %s31, 0
      %p52 = por %p50, %p51
      %p53 = scmp.ne.s32.totalorder %s39, %s40
      %p54 = scmp.eq.s32.totalorder %s32, 1
      %p55 = por %p53, %p54
      %p57 = scmp.ne.s32.totalorder %s40, %s56
      %p58 = scmp.eq.s32.totalorder %s32, 0
      %p59 = por %p57, %p58
      %s61 = sadd.s32 %s60, 1
      %p64 = scmp.eq.s32.totalorder %s26, 1
      %p65 = scmp.ne.s32.totalorder %s60, %s62
      %p66 = scmp.eq.s32.totalorder %s26, 0
      %p67 = por %p65, %p66
      %p68 = scmp.ne.s32.totalorder %s60, %s62
      %p69 = scmp.eq.s32.totalorder %s31, 1
      %p70 = por %p68, %p69
      %p71 = scmp.ne.s32.totalorder %s62, %s63
      %p72 = scmp.eq.s32.totalorder %s31, 0
      %p73 = por %p71, %p72
      %p74 = scmp.ne.s32.totalorder %s62, %s63
      %p75 = scmp.eq.s32.totalorder %s32, 1
      %p76 = por %p74, %p75
      %p78 = scmp.ne.s32.totalorder %s63, %s77
      %p79 = scmp.eq.s32.totalorder %s32, 0
      %p80 = por %p78, %p79
      %s82 = sadd.s32 %s81, 1
      %p85 = scmp.eq.s32.totalorder %s26, 1
      %p86 = scmp.ne.s32.totalorder %s81, %s83
      %p87 = scmp.eq.s32.totalorder %s26, 0
      %p88 = por %p86, %p87
      %p89 = scmp.ne.s32.totalorder %s81, %s83
      %p90 = scmp.eq.s32.totalorder %s31, 1
      %p91 = por %p89, %p90
      %p92 = scmp.ne.s32.totalorder %s83, %s84
      %p93 = scmp.eq.s32.totalorder %s31, 0
      %p94 = por %p92, %p93
      %p95 = scmp.ne.s32.totalorder %s83, %s84
      %p96 = scmp.eq.s32.totalorder %s32, 1
      %p97 = por %p95, %p96
      %p99 = scmp.ne.s32.totalorder %s84, %s98
      %p100 = scmp.eq.s32.totalorder %s32, 0
      %p101 = por %p99, %p100
      %s103 = sadd.s32 %s102, 1
      %p106 = scmp.eq.s32.totalorder %s26, 1
      %p107 = scmp.ne.s32.totalorder %s102, %s104
      %p108 = scmp.eq.s32.totalorder %s26, 0
      %p109 = por %p107, %p108
      %p110 = scmp.ne.s32.totalorder %s102, %s104
      %p111 = scmp.eq.s32.totalorder %s31, 1
      %p112 = por %p110, %p111
      %p113 = scmp.ne.s32.totalorder %s104, %s105
      %p114 = scmp.eq.s32.totalorder %s31, 0
      %p115 = por %p113, %p114
      %p116 = scmp.ne.s32.totalorder %s104, %s105
      %p117 = scmp.eq.s32.totalorder %s32, 1
      %p118 = por %p116, %p117
      %p120 = scmp.ne.s32.totalorder %s105, %s119
      %p121 = scmp.eq.s32.totalorder %s32, 0
      %p122 = por %p120, %p121
      %s124 = sadd.s32 %s123, 1
      %p127 = scmp.eq.s32.totalorder %s26, 1
      %p128 = scmp.ne.s32.totalorder %s123, %s125
      %p129 = scmp.eq.s32.totalorder %s26, 0
      %p130 = por %p128, %p129
      %p131 = scmp.ne.s32.totalorder %s123, %s125
      %p132 = scmp.eq.s32.totalorder %s31, 1
      %p133 = por %p131, %p132
      %p134 = scmp.ne.s32.totalorder %s125, %s126
      %p135 = scmp.eq.s32.totalorder %s31, 0
      %p136 = por %p134, %p135
      %p137 = scmp.ne.s32.totalorder %s125, %s126
      %p138 = scmp.eq.s32.totalorder %s32, 1
      %p139 = por %p137, %p138
      %p141 = scmp.ne.s32.totalorder %s126, %s140
      %p142 = scmp.eq.s32.totalorder %s32, 0
      %p143 = por %p141, %p142
      %s145 = sadd.s32 %s144, 1
      %p148 = scmp.eq.s32.totalorder %s26, 1
      %p149 = scmp.ne.s32.totalorder %s144, %s146
      %p150 = scmp.eq.s32.totalorder %s26, 0
      %p151 = por %p149, %p150
      %p152 = scmp.ne.s32.totalorder %s144, %s146
      %p153 = scmp.eq.s32.totalorder %s31, 1
      %p154 = por %p152, %p153
      %p155 = scmp.ne.s32.totalorder %s146, %s147
      %p156 = scmp.eq.s32.totalorder %s31, 0
      %p157 = por %p155, %p156
      %p158 = scmp.ne.s32.totalorder %s146, %s147
      %p159 = scmp.eq.s32.totalorder %s32, 1
      %p160 = por %p158, %p159
      %p162 = scmp.ne.s32.totalorder %s147, %s161
      %p163 = scmp.eq.s32.totalorder %s32, 0
      %p164 = por %p162, %p163
      %s166 = sadd.s32 %s165, 1
      %p169 = scmp.eq.s32.totalorder %s26, 1
      %p170 = scmp.ne.s32.totalorder %s165, %s167
      %p171 = scmp.eq.s32.totalorder %s26, 0
      %p172 = por %p170, %p171
      %p173 = scmp.ne.s32.totalorder %s165, %s167
      %p174 = scmp.eq.s32.totalorder %s31, 1
      %p175 = por %p173, %p174
      %p176 = scmp.ne.s32.totalorder %s167, %s168
      %p177 = scmp.eq.s32.totalorder %s31, 0
      %p178 = por %p176, %p177
      %p179 = scmp.ne.s32.totalorder %s167, %s168
      %p180 = scmp.eq.s32.totalorder %s32, 1
      %p181 = por %p179, %p180
      %p183 = scmp.ne.s32.totalorder %s168, %s182
      %p184 = scmp.eq.s32.totalorder %s32, 0
      %p185 = por %p183, %p184
      %s187 = sadd.s32 %s186, 1
      %p190 = scmp.eq.s32.totalorder %s26, 1
      %p191 = scmp.ne.s32.totalorder %s186, %s188
      %p192 = scmp.eq.s32.totalorder %s26, 0
      %p193 = por %p191, %p192
      %p194 = scmp.ne.s32.totalorder %s186, %s188
      %p195 = scmp.eq.s32.totalorder %s31, 1
      %p196 = por %p194, %p195
      %p197 = scmp.ne.s32.totalorder %s188, %s189
      %p198 = scmp.eq.s32.totalorder %s31, 0
      %p199 = por %p197, %p198
      %p200 = scmp.ne.s32.totalorder %s188, %s189
      %p201 = scmp.eq.s32.totalorder %s32, 1
      %p202 = por %p200, %p201
      %p204 = scmp.ne.s32.totalorder %s189, %s203
      %p205 = scmp.eq.s32.totalorder %s32, 0
      %p206 = por %p204, %p205
      %s208 = sadd.s32 %s207, 1
      %p211 = scmp.eq.s32.totalorder %s26, 1
      %p212 = scmp.ne.s32.totalorder %s207, %s209
      %p213 = scmp.eq.s32.totalorder %s26, 0
      %p214 = por %p212, %p213
      %p215 = scmp.ne.s32.totalorder %s207, %s209
      %p216 = scmp.eq.s32.totalorder %s31, 1
      %p217 = por %p215, %p216
      %p218 = scmp.ne.s32.totalorder %s209, %s210
      %p219 = scmp.eq.s32.totalorder %s31, 0
      %p220 = por %p218, %p219
      %p221 = scmp.ne.s32.totalorder %s209, %s210
      %p222 = scmp.eq.s32.totalorder %s32, 1
      %p223 = por %p221, %p222
      %p225 = scmp.ne.s32.totalorder %s210, %s224
      %p226 = scmp.eq.s32.totalorder %s32, 0
      %p227 = por %p225, %p226
      %s229 = sadd.s32 %s228, 1
      %p232 = scmp.eq.s32.totalorder %s26, 1
      %p233 = scmp.ne.s32.totalorder %s228, %s230
      %p234 = scmp.eq.s32.totalorder %s26, 0
      %p235 = por %p233, %p234
      %p236 = scmp.ne.s32.totalorder %s228, %s230
      %p237 = scmp.eq.s32.totalorder %s31, 1
      %p238 = por %p236, %p237
      %p239 = scmp.ne.s32.totalorder %s230, %s231
      %p240 = scmp.eq.s32.totalorder %s31, 0
      %p241 = por %p239, %p240
      %p242 = scmp.ne.s32.totalorder %s230, %s231
      %p243 = scmp.eq.s32.totalorder %s32, 1
      %p244 = por %p242, %p243
      %p246 = scmp.ne.s32.totalorder %s231, %s245
      %p247 = scmp.eq.s32.totalorder %s32, 0
      %p248 = por %p246, %p247
      %s250 = sadd.s32 %s249, 1
      %p253 = scmp.eq.s32.totalorder %s26, 1
      %p254 = scmp.ne.s32.totalorder %s249, %s251
      %p255 = scmp.eq.s32.totalorder %s26, 0
      %p256 = por %p254, %p255
      %p257 = scmp.ne.s32.totalorder %s249, %s251
      %p258 = scmp.eq.s32.totalorder %s31, 1
      %p259 = por %p257, %p258
      %p260 = scmp.ne.s32.totalorder %s251, %s252
      %p261 = scmp.eq.s32.totalorder %s31, 0
      %p262 = por %p260, %p261
      %p263 = scmp.ne.s32.totalorder %s251, %s252
      %p264 = scmp.eq.s32.totalorder %s32, 1
      %p265 = por %p263, %p264
      %p267 = scmp.ne.s32.totalorder %s252, %s266
      %p268 = scmp.eq.s32.totalorder %s32, 0
      %p269 = por %p267, %p268
      %s271 = sadd.s32 %s270, 1
      %p274 = scmp.eq.s32.totalorder %s26, 1
      %p275 = scmp.ne.s32.totalorder %s270, %s272
      %p276 = scmp.eq.s32.totalorder %s26, 0
      %p277 = por %p275, %p276
      %p278 = scmp.ne.s32.totalorder %s270, %s272
      %p279 = scmp.eq.s32.totalorder %s31, 1
      %p280 = por %p278, %p279
      %p281 = scmp.ne.s32.totalorder %s272, %s273
      %p282 = scmp.eq.s32.totalorder %s31, 0
      %p283 = por %p281, %p282
      %p284 = scmp.ne.s32.totalorder %s272, %s273
      %p285 = scmp.eq.s32.totalorder %s32, 1
      %p286 = por %p284, %p285
      %p288 = scmp.ne.s32.totalorder %s273, %s287
      %p289 = scmp.eq.s32.totalorder %s32, 0
      %p290 = por %p288, %p289
      %s292 = sadd.s32 %s291, 1
      %p295 = scmp.eq.s32.totalorder %s26, 1
      %p296 = scmp.ne.s32.totalorder %s291, %s293
      %p297 = scmp.eq.s32.totalorder %s26, 0
      %p298 = por %p296, %p297
      %p299 = scmp.ne.s32.totalorder %s291, %s293
      %p300 = scmp.eq.s32.totalorder %s31, 1
      %p301 = por %p299, %p300
      %p302 = scmp.ne.s32.totalorder %s293, %s294
      %p303 = scmp.eq.s32.totalorder %s31, 0
      %p304 = por %p302, %p303
      %p305 = scmp.ne.s32.totalorder %s293, %s294
      %p306 = scmp.eq.s32.totalorder %s32, 1
      %p307 = por %p305, %p306
      %p309 = scmp.ne.s32.totalorder %s294, %s308
      %p310 = scmp.eq.s32.totalorder %s32, 0
      %p311 = por %p309, %p310
      %s313 = sadd.s32 %s312, 1
      %p316 = scmp.eq.s32.totalorder %s26, 1
      %p317 = scmp.ne.s32.totalorder %s312, %s314
      %p318 = scmp.eq.s32.totalorder %s26, 0
      %p319 = por %p317, %p318
      %p320 = scmp.ne.s32.totalorder %s312, %s314
      %p321 = scmp.eq.s32.totalorder %s31, 1
      %p322 = por %p320, %p321
      %p323 = scmp.ne.s32.totalorder %s314, %s315
      %p324 = scmp.eq.s32.totalorder %s31, 0
      %p325 = por %p323, %p324
      %p326 = scmp.ne.s32.totalorder %s314, %s315
      %p327 = scmp.eq.s32.totalorder %s32, 1
      %p328 = por %p326, %p327
      %p330 = scmp.ne.s32.totalorder %s315, %s329
      %p331 = scmp.eq.s32.totalorder %s32, 0
      %p332 = por %p330, %p331
      %s334 = sadd.s32 %s333, 1
      %p337 = scmp.eq.s32.totalorder %s26, 1
      %p338 = scmp.ne.s32.totalorder %s333, %s335
      %p339 = scmp.eq.s32.totalorder %s26, 0
      %p340 = por %p338, %p339
      %p341 = scmp.ne.s32.totalorder %s333, %s335
      %p342 = scmp.eq.s32.totalorder %s31, 1
      %p343 = por %p341, %p342
      %p344 = scmp.ne.s32.totalorder %s335, %s336
      %p345 = scmp.eq.s32.totalorder %s31, 0
      %p346 = por %p344, %p345
      %p347 = scmp.ne.s32.totalorder %s335, %s336
      %p348 = scmp.eq.s32.totalorder %s32, 1
      %p349 = por %p347, %p348
      %p351 = scmp.ne.s32.totalorder %s336, %s350
      %p352 = scmp.eq.s32.totalorder %s32, 0
      %p353 = por %p351, %p352
      %s355 = sadd.s32 %s354, 1
      %p358 = scmp.eq.s32.totalorder %s26, 1
      %p359 = scmp.ne.s32.totalorder %s354, %s356
      %p360 = scmp.eq.s32.totalorder %s26, 0
      %p361 = por %p359, %p360
      %p362 = scmp.ne.s32.totalorder %s354, %s356
      %p363 = scmp.eq.s32.totalorder %s31, 1
      %p364 = por %p362, %p363
      %p365 = scmp.ne.s32.totalorder %s356, %s357
      %p366 = scmp.eq.s32.totalorder %s31, 0
      %p367 = por %p365, %p366
      %p368 = scmp.ne.s32.totalorder %s356, %s357
      %p369 = scmp.eq.s32.totalorder %s32, 1
      %p370 = por %p368, %p369
      %p372 = scmp.ne.s32.totalorder %s357, %s371
      %p373 = scmp.eq.s32.totalorder %s32, 0
      %p374 = por %p372, %p373
      %s376 = sadd.s32 %s375, 1
      %p379 = scmp.eq.s32.totalorder %s26, 1
      %p380 = scmp.ne.s32.totalorder %s375, %s377
      %p381 = scmp.eq.s32.totalorder %s26, 0
      %p382 = por %p380, %p381
      %p383 = scmp.ne.s32.totalorder %s375, %s377
      %p384 = scmp.eq.s32.totalorder %s31, 1
      %p385 = por %p383, %p384
      %p386 = scmp.ne.s32.totalorder %s377, %s378
      %p387 = scmp.eq.s32.totalorder %s31, 0
      %p388 = por %p386, %p387
      %p389 = scmp.ne.s32.totalorder %s377, %s378
      %p390 = scmp.eq.s32.totalorder %s32, 1
      %p391 = por %p389, %p390
      %p393 = scmp.ne.s32.totalorder %s378, %s392
      %p394 = scmp.eq.s32.totalorder %s32, 0
      %p395 = por %p393, %p394
      %s396 = ssub.s32 %s26, %s33
      %p397 = scmp.eq.s32.totalorder %s396, 0
      %s399 = sadd.s32 %s398, 1
      %s400 = scalar_select %p397, %s398, %s399
      %p403 = pneg %p397
      %p404 = scmp.eq.s32.totalorder %s26, 1
      %p405 = por %p403, %p404
      %p406 = scmp.ne.s32.totalorder %s398, %s401
      %p407 = scmp.eq.s32.totalorder %s26, 0
      %p408 = por %p406, %p407
      %p409 = scmp.ne.s32.totalorder %s398, %s401
      %p410 = scmp.eq.s32.totalorder %s31, 1
      %p411 = por %p409, %p410
      %p412 = scmp.ne.s32.totalorder %s401, %s402
      %p413 = scmp.eq.s32.totalorder %s31, 0
      %p414 = por %p412, %p413
      %p415 = scmp.ne.s32.totalorder %s401, %s402
      %p416 = scmp.eq.s32.totalorder %s32, 1
      %p417 = por %p415, %p416
      %p419 = scmp.ne.s32.totalorder %s402, %s418
      %p420 = scmp.eq.s32.totalorder %s32, 0
      %p421 = por %p419, %p420
      %p422 = scmp.le.s32.totalorder 1, %s26
      %p423 = scmp.lt.s32.totalorder %s26, 3
      %p424 = pnand %p422, %p423
      %p425 = pneg %p424
      // Predicated region
      $region9: #{transformer_layer_forward.1} parent=5 // pred_check
        _
      $region10: #{transformer_layer_forward.1} parent=5 // pred_check_branch
        %427 = sbr.rel (%p424) target = $region12
      $region11: #{transformer_layer_forward.1} parent=5 // pred_region
        %s428 = ssub.s32 %s26, 1
        // Predicated region
        $region13: #{transformer_layer_forward.1} parent=11 // pred_check
          %p429 = pneg %p73
        $region14: #{transformer_layer_forward.1} parent=11 // pred_check_branch
          %431 = sbr.rel (%p429) target = $region16
        $region15: #{transformer_layer_forward.1} parent=11 // pred_region
          _
        $region16: #{transformer_layer_forward.1} parent=11 // pred_fallthru
          _
        // Predicated region
        $region17: #{transformer_layer_forward.1} parent=11 // pred_check
          %p432 = pneg %p94
        $region18: #{transformer_layer_forward.1} parent=11 // pred_check_branch
          %434 = sbr.rel (%p432) target = $region20
        $region19: #{transformer_layer_forward.1} parent=11 // pred_region
          _
        $region20: #{transformer_layer_forward.1} parent=11 // pred_fallthru
          _
        // Predicated region
        $region21: #{transformer_layer_forward.1} parent=11 // pred_check
          %p435 = pneg %p115
        $region22: #{transformer_layer_forward.1} parent=11 // pred_check_branch
          %437 = sbr.rel (%p435) target = $region24
        $region23: #{transformer_layer_forward.1} parent=11 // pred_region
          _
        $region24: #{transformer_layer_forward.1} parent=11 // pred_fallthru
          _
        // Predicated region
        $region25: #{transformer_layer_forward.1} parent=11 // pred_check
          %p438 = pneg %p136
        $region26: #{transformer_layer_forward.1} parent=11 // pred_check_branch
          %440 = sbr.rel (%p438) target = $region28
        $region27: #{transformer_layer_forward.1} parent=11 // pred_region
          _
        $region28: #{transformer_layer_forward.1} parent=11 // pred_fallthru
          _
        // Predicated region
        $region29: #{transformer_layer_forward.1} parent=11 // pred_check
          %p441 = pneg %p157
        $region30: #{transformer_layer_forward.1} parent=11 // pred_check_branch
          %443 = sbr.rel (%p441) target = $region32
        $region31: #{transformer_layer_forward.1} parent=11 // pred_region
          _
        $region32: #{transformer_layer_forward.1} parent=11 // pred_fallthru
          _
        // Predicated region
        $region33: #{transformer_layer_forward.1} parent=11 // pred_check
          %p444 = pneg %p178
        $region34: #{transformer_layer_forward.1} parent=11 // pred_check_branch
          %446 = sbr.rel (%p444) target = $region36
        $region35: #{transformer_layer_forward.1} parent=11 // pred_region
          _
        $region36: #{transformer_layer_forward.1} parent=11 // pred_fallthru
          _
        // Predicated region
        $region37: #{transformer_layer_forward.1} parent=11 // pred_check
          %p447 = pneg %p199
        $region38: #{transformer_layer_forward.1} parent=11 // pred_check_branch
          %449 = sbr.rel (%p447) target = $region40
        $region39: #{transformer_layer_forward.1} parent=11 // pred_region
          _
        $region40: #{transformer_layer_forward.1} parent=11 // pred_fallthru
          _
        // Predicated region
        $region41: #{transformer_layer_forward.1} parent=11 // pred_check
          %p450 = pneg %p220
        $region42: #{transformer_layer_forward.1} parent=11 // pred_check_branch
          %452 = sbr.rel (%p450) target = $region44
        $region43: #{transformer_layer_forward.1} parent=11 // pred_region
          _
        $region44: #{transformer_layer_forward.1} parent=11 // pred_fallthru
          _
        // Predicated region
        $region45: #{transformer_layer_forward.1} parent=11 // pred_check
          %p453 = pneg %p241
        $region46: #{transformer_layer_forward.1} parent=11 // pred_check_branch
          %455 = sbr.rel (%p453) target = $region48
        $region47: #{transformer_layer_forward.1} parent=11 // pred_region
          _
        $region48: #{transformer_layer_forward.1} parent=11 // pred_fallthru
          _
        // Predicated region
        $region49: #{transformer_layer_forward.1} parent=11 // pred_check
          %p456 = pneg %p262
        $region50: #{transformer_layer_forward.1} parent=11 // pred_check_branch
          %458 = sbr.rel (%p456) target = $region52
        $region51: #{transformer_layer_forward.1} parent=11 // pred_region
          _
        $region52: #{transformer_layer_forward.1} parent=11 // pred_fallthru
          _
        // Predicated region
        $region53: #{transformer_layer_forward.1} parent=11 // pred_check
          %p459 = pneg %p283
        $region54: #{transformer_layer_forward.1} parent=11 // pred_check_branch
          %461 = sbr.rel (%p459) target = $region56
        $region55: #{transformer_layer_forward.1} parent=11 // pred_region
          _
        $region56: #{transformer_layer_forward.1} parent=11 // pred_fallthru
          _
        // Predicated region
        $region57: #{transformer_layer_forward.1} parent=11 // pred_check
          %p462 = pneg %p304
        $region58: #{transformer_layer_forward.1} parent=11 // pred_check_branch
          %464 = sbr.rel (%p462) target = $region60
        $region59: #{transformer_layer_forward.1} parent=11 // pred_region
          _
        $region60: #{transformer_layer_forward.1} parent=11 // pred_fallthru
          _
        // Predicated region
        $region61: #{transformer_layer_forward.1} parent=11 // pred_check
          %p465 = pneg %p325
        $region62: #{transformer_layer_forward.1} parent=11 // pred_check_branch
          %467 = sbr.rel (%p465) target = $region64
        $region63: #{transformer_layer_forward.1} parent=11 // pred_region
          _
        $region64: #{transformer_layer_forward.1} parent=11 // pred_fallthru
          _
        // Predicated region
        $region65: #{transformer_layer_forward.1} parent=11 // pred_check
          %p468 = pneg %p346
        $region66: #{transformer_layer_forward.1} parent=11 // pred_check_branch
          %470 = sbr.rel (%p468) target = $region68
        $region67: #{transformer_layer_forward.1} parent=11 // pred_region
          _
        $region68: #{transformer_layer_forward.1} parent=11 // pred_fallthru
          _
        // Predicated region
        $region69: #{transformer_layer_forward.1} parent=11 // pred_check
          %p471 = pneg %p367
        $region70: #{transformer_layer_forward.1} parent=11 // pred_check_branch
          %473 = sbr.rel (%p471) target = $region72
        $region71: #{transformer_layer_forward.1} parent=11 // pred_region
          _
        $region72: #{transformer_layer_forward.1} parent=11 // pred_fallthru
          _
        // Predicated region
        $region73: #{transformer_layer_forward.1} parent=11 // pred_check
          %p474 = pneg %p388
        $region74: #{transformer_layer_forward.1} parent=11 // pred_check_branch
          %476 = sbr.rel (%p474) target = $region76
        $region75: #{transformer_layer_forward.1} parent=11 // pred_region
          _
        $region76: #{transformer_layer_forward.1} parent=11 // pred_fallthru
          _
      $region12: #{transformer_layer_forward.1} parent=5 // pred_fallthru
        _
      %p477 = scmp.lt.s32.totalorder %s26, 2
      // Predicated region
      $region77: #{transformer_layer_forward.1} parent=5 // pred_check
        %p478 = pneg %p477
      $region78: #{transformer_layer_forward.1} parent=5 // pred_check_branch
        %480 = sbr.rel (%p478) target = $region80
      $region79: #{transformer_layer_forward.1} parent=5 // pred_region
        // Predicated region
        $region81: #{transformer_layer_forward.1} parent=79 // pred_check
          %p481 = pneg %p46
        $region82: #{transformer_layer_forward.1} parent=79 // pred_check_branch
          %483 = sbr.rel (%p481) target = $region84
        $region83: #{transformer_layer_forward.1} parent=79 // pred_region
          %p484 = scmp.lt.s32.totalorder %s26, 1
          %s485 = scalar_select %p484, %s26, 1
          %s486 = smul.addr %s485, 8
          %s487 = scalar_lea.vmem %s0, %s486
        $region84: #{transformer_layer_forward.1} parent=79 // pred_fallthru
          _
      $region80: #{transformer_layer_forward.1} parent=5 // pred_fallthru
        _
      %p488 = scmp.le.s32.totalorder 1, %s26
      %p489 = scmp.lt.s32.totalorder %s26, 3
      %p490 = pnand %p488, %p489
      %p491 = pneg %p490
      // Predicated region
      $region85: #{transformer_layer_forward.1} parent=5 // pred_check
        _
      $region86: #{transformer_layer_forward.1} parent=5 // pred_check_branch
        %493 = sbr.rel (%p490) target = $region88
      $region87: #{transformer_layer_forward.1} parent=5 // pred_region
        %s494 = ssub.s32 %s26, 1
        %p495 = scmp.lt.s32.totalorder %s31, 1
        %s496 = scalar_select %p495, %s31, 1
        %s497 = smul.addr %s496, 8
        %s498 = scalar_lea.vmem %s0, %s497
        %p499 = pneg %p52
        %p500 = pneg %p49
        %p501 = pneg %p73
        %p502 = pneg %p70
        %p503 = pneg %p94
        %p504 = pneg %p91
        %p505 = pneg %p115
        %p506 = pneg %p112
        %p507 = pneg %p136
        %p508 = pneg %p133
        %p509 = pneg %p157
        %p510 = pneg %p154
        %p511 = pneg %p178
        %p512 = pneg %p175
        %p513 = pneg %p199
        %p514 = pneg %p196
        %p515 = pneg %p220
        %p516 = pneg %p217
        %p517 = pneg %p241
        %p518 = pneg %p238
        %p519 = pneg %p262
        %p520 = pneg %p259
        %p521 = pneg %p283
        %p522 = pneg %p280
        %p523 = pneg %p304
        %p524 = pneg %p301
        %p525 = pneg %p325
        %p526 = pneg %p322
        %p527 = pneg %p346
        %p528 = pneg %p343
        %p529 = pneg %p367
        %p530 = pneg %p364
        %p531 = pneg %p388
        %p532 = pneg %p385
        %p533 = pneg %p414
        %p534 = pneg %p411
        %s535 = sand.u32 %s401, 1
        %s536 = scalar_lea.sflag [#allocation3], %s535
        %s537 = sand.u32 %s401, 1
        %s538 = smul.addr %s537, 8
        %s539 = scalar_lea.vmem [#allocation2], %s538
        %p540 = scmp.lt.s32.totalorder %s31, 1
        %s541 = scalar_select %p540, %s31, 1
        %s542 = smul.addr %s541, 8
        %s543 = scalar_lea.vmem %s0, %s542
        %v545 = vld [vmem:[%s543] sm:$0xff]
        %vm546 = vcmask 261120
        %v547 = vsel %vm546, %v545, 0.0
        %548 = vadd.xlane.f32.xlu0 %v547
        %v549 = vpop.xlane.xlu0 %548
        %v550 = vrcp.pop 32.0
        %v551 = vmul.f32 32.0, %v550
        %v552 = vsub.f32 1.0, %v551
        %v553 = vmul.f32 %v550, %v552
        %v554 = vadd.f32 %v550, %v553
        %vm555 = vweird.f32 %v550
        %v556 = vsel %vm555, %v550, %v554
        %v557 = vmul.f32 %v549, %v556
        %v558 = vsub.f32 %v545, %v557
        %v559 = vmul.f32 %v558, %v558
        %v560 = vsel %vm546, %v559, 0.0
        %561 = vadd.xlane.f32.xlu0 %v560
        %v562 = vpop.xlane.xlu0 %561
        %v563 = vmul.f32 %v562, %v556
        %v564 = vadd.f32 %v563, 1e-05
        %v565 = vrsqrt.pop %v564
        %v566 = vmul.f32 %v565, %v564
        %v567 = vmul.f32 %v566, %v565
        %v568 = vmul.f32 0.5, %v567
        %v569 = vsub.f32 1.5, %v568
        %v570 = vmul.f32 %v565, %v569
        %vm571 = vweird.f32 %v564
        %vm572 = vweird.f32 %v565
        %vm573 = vmor %vm571, %vm572
        %v574 = vsel %vm573, %v565, %v570
        %v575 = vmul.f32 %v558, %v574
        %v576 = vld [vmem:[%s1] sm:$0x1]
        %v578 = vperm.slane %v576, 0
        %v580 = vmul.f32 %v575, %v578
        %v581 = vld [vmem:[%s2] sm:$0x1]
        %v583 = vperm.slane %v581, 0
        %v585 = vadd.f32 %v580, %v583
        %v586 = vpack.c.bf16 %v585, %v585
        %v587 = vld [vmem:[%s3] sm:$0xf]
        %v588 = vld [vmem:[%s3 + $0x4] sm:$0xf]
        %v589 = vld [vmem:[%s3 + $0x8] sm:$0xf]
        %v590 = vld [vmem:[%s3 + $0xc] sm:$0xf]
        %v591 = vld [vmem:[%s3 + $0x10] sm:$0xf]
        %v592 = vld [vmem:[%s3 + $0x14] sm:$0xf]
        %v593 = vld [vmem:[%s3 + $0x18] sm:$0xf]
        %v594 = vld [vmem:[%s3 + $0x1c] sm:$0xf]
        %v595 = vld [vmem:[%s3 + $0x20] sm:$0xf]
        %v596 = vld [vmem:[%s3 + $0x24] sm:$0xf]
        %v597 = vld [vmem:[%s3 + $0x28] sm:$0xf]
        %v598 = vld [vmem:[%s3 + $0x2c] sm:$0xf]
        %v599 = vld [vmem:[%s3 + $0x30] sm:$0xf]
        %v600 = vld [vmem:[%s3 + $0x34] sm:$0xf]
        %v601 = vld [vmem:[%s3 + $0x38] sm:$0xf]
        %v602 = vld [vmem:[%s3 + $0x3c] sm:$0xf]
        %v603 = vld [vmem:[%s4] sm:$0x1]
        %v604 = vld [vmem:[%s4 + $0x1] sm:$0x1]
        %v605 = vld [vmem:[%s4 + $0x2] sm:$0x1]
        %v606 = vld [vmem:[%s4 + $0x3] sm:$0x1]
        %v611 = vperm.slane %v603, 0
        %v612 = vperm.slane %v604, 0
        %v613 = vperm.slane %v605, 0
        %v614 = vperm.slane %v606, 0
        %v623 = vunpack.c.l.b16 %v587
        %v624 = vunpack.c.l.b16 %v588
        %v625 = vunpack.c.l.b16 %v589
        %v626 = vunpack.c.l.b16 %v590
        %v627 = vpack.c.b16 %v624, %v623
        %v628 = vpack.c.b16 %v626, %v625
        %v632 = vsel %vm546, %v586, 0
        %634 = vmatpush.bf16.msra.mxu0 0
        %635 = vmatpush.bf16.msra.mxu0 0
        %636 = vmatpush.bf16.msra.mxu0 0
        %637 = vmatpush.bf16.msra.mxu0 0
        %638 = vmatpush.bf16.msra.mxu0 0
        %639 = vmatpush.bf16.msra.mxu0 0
        %640 = vmatpush.bf16.msra.mxu0 %v628
        %641 = vmatpush.bf16.msra.mxu0 %v627
        %642 = vmatmul.bf16.gmra.mxu0 %v632
        %v643 = vpop.f32.mrf.mxu0
        %v644 = vadd.f32 %v611, %v643
        %v645 = vpop.f32.mrf.mxu0
        %646 = vdwg.mxu0
        %v651 = vunpack.c.l.b16 %v591
        %v652 = vunpack.c.l.b16 %v592
        %v653 = vunpack.c.l.b16 %v593
        %v654 = vunpack.c.l.b16 %v594
        %v655 = vpack.c.b16 %v652, %v651
        %v656 = vpack.c.b16 %v654, %v653
        %659 = vmatpush.bf16.msra.mxu0 0
        %660 = vmatpush.bf16.msra.mxu0 0
        %661 = vmatpush.bf16.msra.mxu0 0
        %662 = vmatpush.bf16.msra.mxu0 0
        %663 = vmatpush.bf16.msra.mxu0 0
        %664 = vmatpush.bf16.msra.mxu0 0
        %665 = vmatpush.bf16.msra.mxu0 %v656
        %666 = vmatpush.bf16.msra.mxu0 %v655
        %667 = vmatmul.bf16.gmra.mxu0 %v632
        %v668 = vpop.f32.mrf.mxu0
        %v669 = vadd.f32 %v612, %v668
        %v670 = vpop.f32.mrf.mxu0
        %671 = vdwg.mxu0
        %v676 = vunpack.c.l.b16 %v595
        %v677 = vunpack.c.l.b16 %v596
        %v678 = vunpack.c.l.b16 %v597
        %v679 = vunpack.c.l.b16 %v598
        %v680 = vpack.c.b16 %v677, %v676
        %v681 = vpack.c.b16 %v679, %v678
        %684 = vmatpush.bf16.msra.mxu0 0
        %685 = vmatpush.bf16.msra.mxu0 0
        %686 = vmatpush.bf16.msra.mxu0 0
        %687 = vmatpush.bf16.msra.mxu0 0
        %688 = vmatpush.bf16.msra.mxu0 0
        %689 = vmatpush.bf16.msra.mxu0 0
        %690 = vmatpush.bf16.msra.mxu0 %v681
        %691 = vmatpush.bf16.msra.mxu0 %v680
        %692 = vmatmul.bf16.gmra.mxu0 %v632
        %v693 = vpop.f32.mrf.mxu0
        %v694 = vadd.f32 %v613, %v693
        %v695 = vpop.f32.mrf.mxu0
        %696 = vdwg.mxu0
        %v701 = vunpack.c.l.b16 %v599
        %v702 = vunpack.c.l.b16 %v600
        %v703 = vunpack.c.l.b16 %v601
        %v704 = vunpack.c.l.b16 %v602
        %v705 = vpack.c.b16 %v702, %v701
        %v706 = vpack.c.b16 %v704, %v703
        %709 = vmatpush.bf16.msra.mxu0 0
        %710 = vmatpush.bf16.msra.mxu0 0
        %711 = vmatpush.bf16.msra.mxu0 0
        %712 = vmatpush.bf16.msra.mxu0 0
        %713 = vmatpush.bf16.msra.mxu0 0
        %714 = vmatpush.bf16.msra.mxu0 0
        %715 = vmatpush.bf16.msra.mxu0 %v706
        %716 = vmatpush.bf16.msra.mxu0 %v705
        %717 = vmatmul.bf16.gmra.mxu0 %v632
        %v718 = vpop.f32.mrf.mxu0
        %v719 = vadd.f32 %v614, %v718
        %v720 = vpop.f32.mrf.mxu0
        %721 = vdwg.mxu0
        %v722 = vld [vmem:[%s5] sm:$0xf]
        %v723 = vld [vmem:[%s5 + $0x4] sm:$0xf]
        %v724 = vld [vmem:[%s5 + $0x8] sm:$0xf]
        %v725 = vld [vmem:[%s5 + $0xc] sm:$0xf]
        %v726 = vld [vmem:[%s5 + $0x10] sm:$0xf]
        %v727 = vld [vmem:[%s5 + $0x14] sm:$0xf]
        %v728 = vld [vmem:[%s5 + $0x18] sm:$0xf]
        %v729 = vld [vmem:[%s5 + $0x1c] sm:$0xf]
        %v730 = vld [vmem:[%s5 + $0x20] sm:$0xf]
        %v731 = vld [vmem:[%s5 + $0x24] sm:$0xf]
        %v732 = vld [vmem:[%s5 + $0x28] sm:$0xf]
        %v733 = vld [vmem:[%s5 + $0x2c] sm:$0xf]
        %v734 = vld [vmem:[%s5 + $0x30] sm:$0xf]
        %v735 = vld [vmem:[%s5 + $0x34] sm:$0xf]
        %v736 = vld [vmem:[%s5 + $0x38] sm:$0xf]
        %v737 = vld [vmem:[%s5 + $0x3c] sm:$0xf]
        %v738 = vld [vmem:[%s6] sm:$0x1]
        %v739 = vld [vmem:[%s6 + $0x1] sm:$0x1]
        %v740 = vld [vmem:[%s6 + $0x2] sm:$0x1]
        %v741 = vld [vmem:[%s6 + $0x3] sm:$0x1]
        %v746 = vperm.slane %v738, 0
        %v747 = vperm.slane %v739, 0
        %v748 = vperm.slane %v740, 0
        %v749 = vperm.slane %v741, 0
        %v758 = vunpack.c.l.b16 %v722
        %v759 = vunpack.c.l.b16 %v723
        %v760 = vunpack.c.l.b16 %v724
        %v761 = vunpack.c.l.b16 %v725
        %v762 = vpack.c.b16 %v759, %v758
        %v763 = vpack.c.b16 %v761, %v760
        %766 = vmatpush.bf16.msra.mxu0 0
        %767 = vmatpush.bf16.msra.mxu0 0
        %768 = vmatpush.bf16.msra.mxu0 0
        %769 = vmatpush.bf16.msra.mxu0 0
        %770 = vmatpush.bf16.msra.mxu0 0
        %771 = vmatpush.bf16.msra.mxu0 0
        %772 = vmatpush.bf16.msra.mxu0 %v763
        %773 = vmatpush.bf16.msra.mxu0 %v762
        %774 = vmatmul.bf16.gmra.mxu0 %v632
        %v775 = vpop.f32.mrf.mxu0
        %v776 = vadd.f32 %v746, %v775
        %v777 = vpop.f32.mrf.mxu0
        %778 = vdwg.mxu0
        %v783 = vunpack.c.l.b16 %v726
        %v784 = vunpack.c.l.b16 %v727
        %v785 = vunpack.c.l.b16 %v728
        %v786 = vunpack.c.l.b16 %v729
        %v787 = vpack.c.b16 %v784, %v783
        %v788 = vpack.c.b16 %v786, %v785
        %791 = vmatpush.bf16.msra.mxu0 0
        %792 = vmatpush.bf16.msra.mxu0 0
        %793 = vmatpush.bf16.msra.mxu0 0
        %794 = vmatpush.bf16.msra.mxu0 0
        %795 = vmatpush.bf16.msra.mxu0 0
        %796 = vmatpush.bf16.msra.mxu0 0
        %797 = vmatpush.bf16.msra.mxu0 %v788
        %798 = vmatpush.bf16.msra.mxu0 %v787
        %799 = vmatmul.bf16.gmra.mxu0 %v632
        %v800 = vpop.f32.mrf.mxu0
        %v801 = vadd.f32 %v747, %v800
        %v802 = vpop.f32.mrf.mxu0
        %803 = vdwg.mxu0
        %v808 = vunpack.c.l.b16 %v730
        %v809 = vunpack.c.l.b16 %v731
        %v810 = vunpack.c.l.b16 %v732
        %v811 = vunpack.c.l.b16 %v733
        %v812 = vpack.c.b16 %v809, %v808
        %v813 = vpack.c.b16 %v811, %v810
        %816 = vmatpush.bf16.msra.mxu0 0
        %817 = vmatpush.bf16.msra.mxu0 0
        %818 = vmatpush.bf16.msra.mxu0 0
        %819 = vmatpush.bf16.msra.mxu0 0
        %820 = vmatpush.bf16.msra.mxu0 0
        %821 = vmatpush.bf16.msra.mxu0 0
        %822 = vmatpush.bf16.msra.mxu0 %v813
        %823 = vmatpush.bf16.msra.mxu0 %v812
        %824 = vmatmul.bf16.gmra.mxu0 %v632
        %v825 = vpop.f32.mrf.mxu0
        %v826 = vadd.f32 %v748, %v825
        %v827 = vpop.f32.mrf.mxu0
        %828 = vdwg.mxu0
        %v833 = vunpack.c.l.b16 %v734
        %v834 = vunpack.c.l.b16 %v735
        %v835 = vunpack.c.l.b16 %v736
        %v836 = vunpack.c.l.b16 %v737
        %v837 = vpack.c.b16 %v834, %v833
        %v838 = vpack.c.b16 %v836, %v835
        %841 = vmatpush.bf16.msra.mxu0 0
        %842 = vmatpush.bf16.msra.mxu0 0
        %843 = vmatpush.bf16.msra.mxu0 0
        %844 = vmatpush.bf16.msra.mxu0 0
        %845 = vmatpush.bf16.msra.mxu0 0
        %846 = vmatpush.bf16.msra.mxu0 0
        %847 = vmatpush.bf16.msra.mxu0 %v838
        %848 = vmatpush.bf16.msra.mxu0 %v837
        %849 = vmatmul.bf16.gmra.mxu0 %v632
        %v850 = vpop.f32.mrf.mxu0
        %v851 = vadd.f32 %v749, %v850
        %v852 = vpop.f32.mrf.mxu0
        %853 = vdwg.mxu0
        %v854 = vld [vmem:[%s7] sm:$0xf]
        %v855 = vld [vmem:[%s7 + $0x4] sm:$0xf]
        %v856 = vld [vmem:[%s7 + $0x8] sm:$0xf]
        %v857 = vld [vmem:[%s7 + $0xc] sm:$0xf]
        %v858 = vld [vmem:[%s7 + $0x10] sm:$0xf]
        %v859 = vld [vmem:[%s7 + $0x14] sm:$0xf]
        %v860 = vld [vmem:[%s7 + $0x18] sm:$0xf]
        %v861 = vld [vmem:[%s7 + $0x1c] sm:$0xf]
        %v862 = vld [vmem:[%s7 + $0x20] sm:$0xf]
        %v863 = vld [vmem:[%s7 + $0x24] sm:$0xf]
        %v864 = vld [vmem:[%s7 + $0x28] sm:$0xf]
        %v865 = vld [vmem:[%s7 + $0x2c] sm:$0xf]
        %v866 = vld [vmem:[%s7 + $0x30] sm:$0xf]
        %v867 = vld [vmem:[%s7 + $0x34] sm:$0xf]
        %v868 = vld [vmem:[%s7 + $0x38] sm:$0xf]
        %v869 = vld [vmem:[%s7 + $0x3c] sm:$0xf]
        %v870 = vld [vmem:[%s8] sm:$0x1]
        %v871 = vld [vmem:[%s8 + $0x1] sm:$0x1]
        %v872 = vld [vmem:[%s8 + $0x2] sm:$0x1]
        %v873 = vld [vmem:[%s8 + $0x3] sm:$0x1]
        %v878 = vperm.slane %v870, 0
        %v879 = vperm.slane %v871, 0
        %v880 = vperm.slane %v872, 0
        %v881 = vperm.slane %v873, 0
        %v890 = vunpack.c.l.b16 %v854
        %v891 = vunpack.c.l.b16 %v855
        %v892 = vunpack.c.l.b16 %v856
        %v893 = vunpack.c.l.b16 %v857
        %v894 = vpack.c.b16 %v891, %v890
        %v895 = vpack.c.b16 %v893, %v892
        %898 = vmatpush.bf16.msra.mxu0 0
        %899 = vmatpush.bf16.msra.mxu0 0
        %900 = vmatpush.bf16.msra.mxu0 0
        %901 = vmatpush.bf16.msra.mxu0 0
        %902 = vmatpush.bf16.msra.mxu0 0
        %903 = vmatpush.bf16.msra.mxu0 0
        %904 = vmatpush.bf16.msra.mxu0 %v895
        %905 = vmatpush.bf16.msra.mxu0 %v894
        %906 = vmatmul.bf16.gmra.mxu0 %v632
        %v907 = vpop.f32.mrf.mxu0
        %v908 = vadd.f32 %v878, %v907
        %v909 = vpop.f32.mrf.mxu0
        %910 = vdwg.mxu0
        %v915 = vunpack.c.l.b16 %v858
        %v916 = vunpack.c.l.b16 %v859
        %v917 = vunpack.c.l.b16 %v860
        %v918 = vunpack.c.l.b16 %v861
        %v919 = vpack.c.b16 %v916, %v915
        %v920 = vpack.c.b16 %v918, %v917
        %923 = vmatpush.bf16.msra.mxu0 0
        %924 = vmatpush.bf16.msra.mxu0 0
        %925 = vmatpush.bf16.msra.mxu0 0
        %926 = vmatpush.bf16.msra.mxu0 0
        %927 = vmatpush.bf16.msra.mxu0 0
        %928 = vmatpush.bf16.msra.mxu0 0
        %929 = vmatpush.bf16.msra.mxu0 %v920
        %930 = vmatpush.bf16.msra.mxu0 %v919
        %931 = vmatmul.bf16.gmra.mxu0 %v632
        %v932 = vpop.f32.mrf.mxu0
        %v933 = vadd.f32 %v879, %v932
        %v934 = vpop.f32.mrf.mxu0
        %935 = vdwg.mxu0
        %v940 = vunpack.c.l.b16 %v862
        %v941 = vunpack.c.l.b16 %v863
        %v942 = vunpack.c.l.b16 %v864
        %v943 = vunpack.c.l.b16 %v865
        %v944 = vpack.c.b16 %v941, %v940
        %v945 = vpack.c.b16 %v943, %v942
        %948 = vmatpush.bf16.msra.mxu0 0
        %949 = vmatpush.bf16.msra.mxu0 0
        %950 = vmatpush.bf16.msra.mxu0 0
        %951 = vmatpush.bf16.msra.mxu0 0
        %952 = vmatpush.bf16.msra.mxu0 0
        %953 = vmatpush.bf16.msra.mxu0 0
        %954 = vmatpush.bf16.msra.mxu0 %v945
        %955 = vmatpush.bf16.msra.mxu0 %v944
        %956 = vmatmul.bf16.gmra.mxu0 %v632
        %v957 = vpop.f32.mrf.mxu0
        %v958 = vadd.f32 %v880, %v957
        %v959 = vpop.f32.mrf.mxu0
        %960 = vdwg.mxu0
        %v965 = vunpack.c.l.b16 %v866
        %v966 = vunpack.c.l.b16 %v867
        %v967 = vunpack.c.l.b16 %v868
        %v968 = vunpack.c.l.b16 %v869
        %v969 = vpack.c.b16 %v966, %v965
        %v970 = vpack.c.b16 %v968, %v967
        %973 = vmatpush.bf16.msra.mxu0 0
        %974 = vmatpush.bf16.msra.mxu0 0
        %975 = vmatpush.bf16.msra.mxu0 0
        %976 = vmatpush.bf16.msra.mxu0 0
        %977 = vmatpush.bf16.msra.mxu0 0
        %978 = vmatpush.bf16.msra.mxu0 0
        %979 = vmatpush.bf16.msra.mxu0 %v970
        %980 = vmatpush.bf16.msra.mxu0 %v969
        %981 = vmatmul.bf16.gmra.mxu0 %v632
        %v982 = vpop.f32.mrf.mxu0
        %v983 = vadd.f32 %v881, %v982
        %v984 = vpop.f32.mrf.mxu0
        %985 = vdwg.mxu0
        %v986 = vpack.c.bf16 %v644, %v644
        %v987 = vpack.c.bf16 %v669, %v669
        %v988 = vpack.c.bf16 %v694, %v694
        %v989 = vpack.c.bf16 %v719, %v719
        %v990 = vpack.c.bf16 %v776, %v776
        %v991 = vpack.c.bf16 %v801, %v801
        %v992 = vpack.c.bf16 %v826, %v826
        %v993 = vpack.c.bf16 %v851, %v851
        %vm994 = vcmask 64512
        %v996 = vsel %vm994, %v986, 0
        %v999 = vsel %vm994, %v990, 0
        %1001 = vmatpush.bf16.xpose.msra.mxu0 0
        %1002 = vmatpush.bf16.xpose.msra.mxu0 0
        %1003 = vmatpush.bf16.xpose.msra.mxu0 0
        %1004 = vmatpush.bf16.xpose.msra.mxu0 0
        %1005 = vmatpush.bf16.xpose.msra.mxu0 0
        %1006 = vmatpush.bf16.xpose.msra.mxu0 0
        %1007 = vmatpush.bf16.xpose.msra.mxu0 0
        %1008 = vmatpush.bf16.xpose.msra.mxu0 %v999
        %1009 = vmatmul.bf16.gmra.mxu0 %v996
        %v1010 = vpop.f32.mrf.mxu0
        %v1011 = vadd.f32 0.0, %v1010
        %v1012 = vpop.f32.mrf.mxu0
        %1013 = vdwg.mxu0
        %v1015 = vsel %vm994, %v987, 0
        %v1018 = vsel %vm994, %v991, 0
        %1020 = vmatpush.bf16.xpose.msra.mxu0 0
        %1021 = vmatpush.bf16.xpose.msra.mxu0 0
        %1022 = vmatpush.bf16.xpose.msra.mxu0 0
        %1023 = vmatpush.bf16.xpose.msra.mxu0 0
        %1024 = vmatpush.bf16.xpose.msra.mxu0 0
        %1025 = vmatpush.bf16.xpose.msra.mxu0 0
        %1026 = vmatpush.bf16.xpose.msra.mxu0 0
        %1027 = vmatpush.bf16.xpose.msra.mxu0 %v1018
        %1028 = vmatmul.bf16.gmra.mxu0 %v1015
        %v1029 = vpop.f32.mrf.mxu0
        %v1030 = vadd.f32 0.0, %v1029
        %v1031 = vpop.f32.mrf.mxu0
        %1032 = vdwg.mxu0
        %v1034 = vsel %vm994, %v988, 0
        %v1037 = vsel %vm994, %v992, 0
        %1039 = vmatpush.bf16.xpose.msra.mxu0 0
        %1040 = vmatpush.bf16.xpose.msra.mxu0 0
        %1041 = vmatpush.bf16.xpose.msra.mxu0 0
        %1042 = vmatpush.bf16.xpose.msra.mxu0 0
        %1043 = vmatpush.bf16.xpose.msra.mxu0 0
        %1044 = vmatpush.bf16.xpose.msra.mxu0 0
        %1045 = vmatpush.bf16.xpose.msra.mxu0 0
        %1046 = vmatpush.bf16.xpose.msra.mxu0 %v1037
        %1047 = vmatmul.bf16.gmra.mxu0 %v1034
        %v1048 = vpop.f32.mrf.mxu0
        %v1049 = vadd.f32 0.0, %v1048
        %v1050 = vpop.f32.mrf.mxu0
        %1051 = vdwg.mxu0
        %v1053 = vsel %vm994, %v989, 0
        %v1056 = vsel %vm994, %v993, 0
        %1058 = vmatpush.bf16.xpose.msra.mxu0 0
        %1059 = vmatpush.bf16.xpose.msra.mxu0 0
        %1060 = vmatpush.bf16.xpose.msra.mxu0 0
        %1061 = vmatpush.bf16.xpose.msra.mxu0 0
        %1062 = vmatpush.bf16.xpose.msra.mxu0 0
        %1063 = vmatpush.bf16.xpose.msra.mxu0 0
        %1064 = vmatpush.bf16.xpose.msra.mxu0 0
        %1065 = vmatpush.bf16.xpose.msra.mxu0 %v1056
        %1066 = vmatmul.bf16.gmra.mxu0 %v1053
        %v1067 = vpop.f32.mrf.mxu0
        %v1068 = vadd.f32 0.0, %v1067
        %v1069 = vpop.f32.mrf.mxu0
        %1070 = vdwg.mxu0
        %v1071 = vmul.f32 %v1011, 0.35355338
        %v1072 = vmul.f32 %v1030, 0.35355338
        %v1073 = vmul.f32 %v1049, 0.35355338
        %v1074 = vmul.f32 %v1068, 0.35355338
        %v1075 = vsel %vm994, %v1071, -inf
        %1076 = vmax.xlane.f32.xlu0 %v1075
        %v1077 = vpop.xlane.xlu0 %1076
        %v1078 = vsel %vm994, %v1072, -inf
        %1079 = vmax.xlane.f32.xlu0 %v1078
        %v1080 = vpop.xlane.xlu0 %1079
        %v1081 = vsel %vm994, %v1073, -inf
        %1082 = vmax.xlane.f32.xlu0 %v1081
        %v1083 = vpop.xlane.xlu0 %1082
        %v1084 = vsel %vm994, %v1074, -inf
        %1085 = vmax.xlane.f32.xlu0 %v1084
        %v1086 = vpop.xlane.xlu0 %1085
        %v1087 = vsub.f32 %v1071, %v1077
        %v1088 = vsub.f32 %v1072, %v1080
        %v1089 = vsub.f32 %v1073, %v1083
        %v1090 = vsub.f32 %v1074, %v1086
        %v1091 = vmul.f32 %v1087, 1.442695
        %v1092 = vpow.pop %v1091
        %v1093 = vmul.f32 %v1088, 1.442695
        %v1094 = vpow.pop %v1093
        %v1095 = vmul.f32 %v1089, 1.442695
        %v1096 = vpow.pop %v1095
        %v1097 = vmul.f32 %v1090, 1.442695
        %v1098 = vpow.pop %v1097
        %v1099 = vsel %vm994, %v1092, 0.0
        %1100 = vadd.xlane.f32.xlu0 %v1099
        %v1101 = vpop.xlane.xlu0 %1100
        %v1102 = vsel %vm994, %v1094, 0.0
        %1103 = vadd.xlane.f32.xlu0 %v1102
        %v1104 = vpop.xlane.xlu0 %1103
        %v1105 = vsel %vm994, %v1096, 0.0
        %1106 = vadd.xlane.f32.xlu0 %v1105
        %v1107 = vpop.xlane.xlu0 %1106
        %v1108 = vsel %vm994, %v1098, 0.0
        %1109 = vadd.xlane.f32.xlu0 %v1108
        %v1110 = vpop.xlane.xlu0 %1109
        %v1111 = vrcp.pop %v1101
        %v1112 = vrcp.pop %v1104
        %v1113 = vrcp.pop %v1107
        %v1114 = vrcp.pop %v1110
        %v1115 = vmul.f32 %v1092, %v1111
        %v1116 = vmul.f32 %v1094, %v1112
        %v1117 = vmul.f32 %v1096, %v1113
        %v1118 = vmul.f32 %v1098, %v1114
        %v1119 = vpack.c.bf16 %v1115, %v1115
        %v1120 = vpack.c.bf16 %v1116, %v1116
        %v1121 = vpack.c.bf16 %v1117, %v1117
        %v1122 = vpack.c.bf16 %v1118, %v1118
        %v1123 = vpack.c.bf16 %v908, %v908
        %v1124 = vpack.c.bf16 %v933, %v933
        %v1125 = vpack.c.bf16 %v958, %v958
        %v1126 = vpack.c.bf16 %v983, %v983
        %v1128 = vsel %vm994, %v1119, 0
        %vm1130 = vcmask 1043456
        %v1132 = vsel %vm1130, %v1123, 0
        %1134 = vmatpush.bf16.msra.mxu0 0
        %1135 = vmatpush.bf16.msra.mxu0 0
        %1136 = vmatpush.bf16.msra.mxu0 0
        %1137 = vmatpush.bf16.msra.mxu0 0
        %1138 = vmatpush.bf16.msra.mxu0 0
        %1139 = vmatpush.bf16.msra.mxu0 0
        %1140 = vmatpush.bf16.msra.mxu0 0
        %1141 = vmatpush.bf16.msra.mxu0 %v1132
        %1142 = vmatmul.bf16.gmra.mxu0 %v1128
        %v1143 = vpop.f32.mrf.mxu0
        %v1144 = vadd.f32 0.0, %v1143
        %v1145 = vpop.f32.mrf.mxu0
        %1146 = vdwg.mxu0
        %v1148 = vsel %vm994, %v1120, 0
        %v1151 = vsel %vm1130, %v1124, 0
        %1153 = vmatpush.bf16.msra.mxu0 0
        %1154 = vmatpush.bf16.msra.mxu0 0
        %1155 = vmatpush.bf16.msra.mxu0 0
        %1156 = vmatpush.bf16.msra.mxu0 0
        %1157 = vmatpush.bf16.msra.mxu0 0
        %1158 = vmatpush.bf16.msra.mxu0 0
        %1159 = vmatpush.bf16.msra.mxu0 0
        %1160 = vmatpush.bf16.msra.mxu0 %v1151
        %1161 = vmatmul.bf16.gmra.mxu0 %v1148
        %v1162 = vpop.f32.mrf.mxu0
        %v1163 = vadd.f32 0.0, %v1162
        %v1164 = vpop.f32.mrf.mxu0
        %1165 = vdwg.mxu0
        %v1167 = vsel %vm994, %v1121, 0
        %v1170 = vsel %vm1130, %v1125, 0
        %1172 = vmatpush.bf16.msra.mxu0 0
        %1173 = vmatpush.bf16.msra.mxu0 0
        %1174 = vmatpush.bf16.msra.mxu0 0
        %1175 = vmatpush.bf16.msra.mxu0 0
        %1176 = vmatpush.bf16.msra.mxu0 0
        %1177 = vmatpush.bf16.msra.mxu0 0
        %1178 = vmatpush.bf16.msra.mxu0 0
        %1179 = vmatpush.bf16.msra.mxu0 %v1170
        %1180 = vmatmul.bf16.gmra.mxu0 %v1167
        %v1181 = vpop.f32.mrf.mxu0
        %v1182 = vadd.f32 0.0, %v1181
        %v1183 = vpop.f32.mrf.mxu0
        %1184 = vdwg.mxu0
        %v1186 = vsel %vm994, %v1122, 0
        %v1189 = vsel %vm1130, %v1126, 0
        %1191 = vmatpush.bf16.msra.mxu0 0
        %1192 = vmatpush.bf16.msra.mxu0 0
        %1193 = vmatpush.bf16.msra.mxu0 0
        %1194 = vmatpush.bf16.msra.mxu0 0
        %1195 = vmatpush.bf16.msra.mxu0 0
        %1196 = vmatpush.bf16.msra.mxu0 0
        %1197 = vmatpush.bf16.msra.mxu0 0
        %1198 = vmatpush.bf16.msra.mxu0 %v1189
        %1199 = vmatmul.bf16.gmra.mxu0 %v1186
        %v1200 = vpop.f32.mrf.mxu0
        %v1201 = vadd.f32 0.0, %v1200
        %v1202 = vpop.f32.mrf.mxu0
        %1203 = vdwg.mxu0
        %v1204 = vpack.c.bf16 %v1144, %v1144
        %v1205 = vpack.c.bf16 %v1163, %v1163
        %v1206 = vpack.c.bf16 %v1182, %v1182
        %v1207 = vpack.c.bf16 %v1201, %v1201
        %v1208 = vld [vmem:[%s9] sm:$0xf]
        %v1209 = vld [vmem:[%s9 + $0x4] sm:$0xf]
        %v1210 = vld [vmem:[%s9 + $0x8] sm:$0xf]
        %v1211 = vld [vmem:[%s9 + $0xc] sm:$0xf]
        %v1213 = vsel %vm994, %v1204, 0
        %v1216 = vsel %vm1130, %v1208, 0
        %1218 = vmatpush.bf16.msra.mxu0 0
        %1219 = vmatpush.bf16.msra.mxu0 0
        %1220 = vmatpush.bf16.msra.mxu0 0
        %1221 = vmatpush.bf16.msra.mxu0 0
        %1222 = vmatpush.bf16.msra.mxu0 0
        %1223 = vmatpush.bf16.msra.mxu0 0
        %1224 = vmatpush.bf16.msra.mxu0 0
        %1225 = vmatpush.bf16.msra.mxu0 %v1216
        %1226 = vmatmul.bf16.gmra.mxu0 %v1213
        %v1227 = vpop.f32.mrf.mxu0
        %v1228 = vadd.f32 0.0, %v1227
        %v1229 = vpop.f32.mrf.mxu0
        %1230 = vdwg.mxu0
        %v1232 = vsel %vm994, %v1205, 0
        %v1235 = vsel %vm1130, %v1209, 0
        %1237 = vmatpush.bf16.msra.mxu0 0
        %1238 = vmatpush.bf16.msra.mxu0 0
        %1239 = vmatpush.bf16.msra.mxu0 0
        %1240 = vmatpush.bf16.msra.mxu0 0
        %1241 = vmatpush.bf16.msra.mxu0 0
        %1242 = vmatpush.bf16.msra.mxu0 0
        %1243 = vmatpush.bf16.msra.mxu0 0
        %1244 = vmatpush.bf16.msra.mxu0 %v1235
        %1245 = vmatmul.bf16.gmra.mxu0 %v1232
        %v1246 = vpop.f32.mrf.mxu0
        %v1247 = vadd.f32 0.0, %v1246
        %v1248 = vpop.f32.mrf.mxu0
        %1249 = vdwg.mxu0
        %v1251 = vsel %vm994, %v1206, 0
        %v1254 = vsel %vm1130, %v1210, 0
        %1256 = vmatpush.bf16.msra.mxu0 0
        %1257 = vmatpush.bf16.msra.mxu0 0
        %1258 = vmatpush.bf16.msra.mxu0 0
        %1259 = vmatpush.bf16.msra.mxu0 0
        %1260 = vmatpush.bf16.msra.mxu0 0
        %1261 = vmatpush.bf16.msra.mxu0 0
        %1262 = vmatpush.bf16.msra.mxu0 0
        %1263 = vmatpush.bf16.msra.mxu0 %v1254
        %1264 = vmatmul.bf16.gmra.mxu0 %v1251
        %v1265 = vpop.f32.mrf.mxu0
        %v1266 = vadd.f32 0.0, %v1265
        %v1267 = vpop.f32.mrf.mxu0
        %1268 = vdwg.mxu0
        %v1270 = vsel %vm994, %v1207, 0
        %v1273 = vsel %vm1130, %v1211, 0
        %1275 = vmatpush.bf16.msra.mxu0 0
        %1276 = vmatpush.bf16.msra.mxu0 0
        %1277 = vmatpush.bf16.msra.mxu0 0
        %1278 = vmatpush.bf16.msra.mxu0 0
        %1279 = vmatpush.bf16.msra.mxu0 0
        %1280 = vmatpush.bf16.msra.mxu0 0
        %1281 = vmatpush.bf16.msra.mxu0 0
        %1282 = vmatpush.bf16.msra.mxu0 %v1273
        %1283 = vmatmul.bf16.gmra.mxu0 %v1270
        %v1284 = vpop.f32.mrf.mxu0
        %v1285 = vadd.f32 0.0, %v1284
        %v1286 = vpop.f32.mrf.mxu0
        %1287 = vdwg.mxu0
        %v1288 = vsel %vm546, %v1228, 0.0
        %v1289 = vsel %vm546, %v1247, 0.0
        %v1290 = vadd.f32 %v1288, %v1289
        %v1291 = vsel %vm546, %v1266, 0.0
        %v1292 = vadd.f32 %v1290, %v1291
        %v1293 = vsel %vm546, %v1285, 0.0
        %v1294 = vadd.f32 %v1292, %v1293
        %v1295 = vld [vmem:[%s10] sm:$0x1]
        %v1297 = vperm.slane %v1295, 0
        %v1299 = vadd.f32 %v1294, %v1297
        %v1300 = vadd.f32 %v545, %v1299
        %v1301 = vsel %vm546, %v1300, 0.0
        %1302 = vadd.xlane.f32.xlu0 %v1301
        %v1303 = vpop.xlane.xlu0 %1302
        %v1304 = vmul.f32 %v1303, %v556
        %v1305 = vsub.f32 %v1300, %v1304
        %v1306 = vmul.f32 %v1305, %v1305
        %v1307 = vsel %vm546, %v1306, 0.0
        %1308 = vadd.xlane.f32.xlu0 %v1307
        %v1309 = vpop.xlane.xlu0 %1308
        %v1310 = vmul.f32 %v1309, %v556
        %v1311 = vadd.f32 %v1310, 1e-05
        %v1312 = vrsqrt.pop %v1311
        %v1313 = vmul.f32 %v1312, %v1311
        %v1314 = vmul.f32 %v1313, %v1312
        %v1315 = vmul.f32 0.5, %v1314
        %v1316 = vsub.f32 1.5, %v1315
        %v1317 = vmul.f32 %v1312, %v1316
        %vm1318 = vweird.f32 %v1311
        %vm1319 = vweird.f32 %v1312
        %vm1320 = vmor %vm1318, %vm1319
        %v1321 = vsel %vm1320, %v1312, %v1317
        %v1322 = vmul.f32 %v1305, %v1321
        %v1323 = vld [vmem:[%s11] sm:$0x1]
        %v1325 = vperm.slane %v1323, 0
        %v1327 = vmul.f32 %v1322, %v1325
        %v1328 = vld [vmem:[%s12] sm:$0x1]
        %v1330 = vperm.slane %v1328, 0
        %v1332 = vadd.f32 %v1327, %v1330
        %v1333 = vpack.c.bf16 %v1332, %v1332
        %v1334 = vld [vmem:[%s13] sm:$0xf]
        %v1335 = vld [vmem:[%s13 + $0x4] sm:$0xf]
        %v1336 = vld [vmem:[%s13 + $0x8] sm:$0xf]
        %v1337 = vld [vmem:[%s13 + $0xc] sm:$0xf]
        %v1338 = vld [vmem:[%s14] sm:$0x1]
        %v1340 = vperm.slane %v1338, 0
        %v1346 = vunpack.c.l.b16 %v1334
        %v1347 = vunpack.c.l.b16 %v1335
        %v1348 = vunpack.c.l.b16 %v1336
        %v1349 = vunpack.c.l.b16 %v1337
        %v1350 = vpack.c.b16 %v1347, %v1346
        %v1351 = vpack.c.b16 %v1349, %v1348
        %v1355 = vsel %vm546, %v1333, 0
        %1357 = vmatpush.bf16.msra.mxu0 0
        %1358 = vmatpush.bf16.msra.mxu0 0
        %1359 = vmatpush.bf16.msra.mxu0 0
        %1360 = vmatpush.bf16.msra.mxu0 0
        %1361 = vmatpush.bf16.msra.mxu0 0
        %1362 = vmatpush.bf16.msra.mxu0 0
        %1363 = vmatpush.bf16.msra.mxu0 %v1351
        %1364 = vmatpush.bf16.msra.mxu0 %v1350
        %1365 = vmatmul.bf16.gmra.mxu0 %v1355
        %v1366 = vpop.f32.mrf.mxu0
        %v1367 = vadd.f32 %v1340, %v1366
        %v1368 = vpop.f32.mrf.mxu0
        %1369 = vdwg.mxu0
        %v1370 = vmax.f32 %v1367, 0.0
        %v1371 = vpack.c.bf16 %v1370, %v1370
        %v1372 = vld [vmem:[%s15] sm:$0xf]
        %v1373 = vld [vmem:[%s15 + $0x4] sm:$0xf]
        %v1374 = vld [vmem:[%s15 + $0x8] sm:$0xf]
        %v1375 = vld [vmem:[%s15 + $0xc] sm:$0xf]
        %v1376 = vld [vmem:[%s15 + $0x10] sm:$0xf]
        %v1377 = vld [vmem:[%s15 + $0x14] sm:$0xf]
        %v1378 = vld [vmem:[%s15 + $0x18] sm:$0xf]
        %v1379 = vld [vmem:[%s15 + $0x1c] sm:$0xf]
        %v1380 = vld [vmem:[%s16] sm:$0x1]
        %v1382 = vperm.slane %v1380, 0
        %v1392 = vunpack.c.l.b16 %v1372
        %v1393 = vunpack.c.l.b16 %v1373
        %v1394 = vunpack.c.l.b16 %v1374
        %v1395 = vunpack.c.l.b16 %v1375
        %v1396 = vunpack.c.l.b16 %v1376
        %v1397 = vunpack.c.l.b16 %v1377
        %v1398 = vunpack.c.l.b16 %v1378
        %v1399 = vunpack.c.l.b16 %v1379
        %v1400 = vpack.c.b16 %v1393, %v1392
        %v1401 = vpack.c.b16 %v1395, %v1394
        %v1402 = vpack.c.b16 %v1397, %v1396
        %v1403 = vpack.c.b16 %v1399, %v1398
        %vm1408 = vcmask 523264
        %v1410 = vsel %vm1408, %v1371, 0
        %1412 = vmatpush.bf16.msra.mxu0 0
        %1413 = vmatpush.bf16.msra.mxu0 0
        %1414 = vmatpush.bf16.msra.mxu0 0
        %1415 = vmatpush.bf16.msra.mxu0 0
        %1416 = vmatpush.bf16.msra.mxu0 %v1403
        %1417 = vmatpush.bf16.msra.mxu0 %v1402
        %1418 = vmatpush.bf16.msra.mxu0 %v1401
        %1419 = vmatpush.bf16.msra.mxu0 %v1400
        %1420 = vmatmul.bf16.gmra.mxu0 %v1410
        %v1421 = vpop.f32.mrf.mxu0
        %v1422 = vadd.f32 %v1382, %v1421
        %v1423 = vpop.f32.mrf.mxu0
        %1424 = vdwg.mxu0
        %v1425 = vadd.f32 %v1300, %v1422
        %1426 = vst.msk [vmem:[%s539] sm:$0xff] %vm546, %v1425
        %s1427 = sand.u32 %s401, 1
        %s1428 = scalar_lea.sflag [#allocation3], %s1427
        %s1429 = sand.u32 %s401, 1
        %s1430 = smul.addr %s1429, 8
        %s1431 = scalar_lea.vmem [#allocation2], %s1430
        // Predicated region
        $region89: #{transformer_layer_forward.1} parent=87 // pred_check
          %p1432 = pneg %p411
        $region90: #{transformer_layer_forward.1} parent=87 // pred_check_branch
          %1434 = sbr.rel (%p1432) target = $region92
        $region91: #{transformer_layer_forward.1} parent=87 // pred_region
          %1436 = vsyncadd %s1428, 0
          %s1437 = smul.addr %s31, 8
          %s1438 = scalar_lea.hbm %s17, %s1437
          %s1440 = sshll.u32 %s1431, 4
          %s1441 = int_to_ptr.vmem [resolvable:$true] %s1440
          %s1442 = sshll.u32 %s1438, 4
          %s1443 = int_to_ptr.hbm [resolvable:$true] %s1442
          %1445 = dma.vmem_to_hbm [thread:$0]  %s1441, 128, %s1443, %s1428
        $region92: #{transformer_layer_forward.1} parent=87 // pred_fallthru
          _
      $region88: #{transformer_layer_forward.1} parent=5 // pred_fallthru
        _
      %p1446 = scmp.le.s32.totalorder 2, %s26
      // Predicated region
      $region93: #{transformer_layer_forward.1} parent=5 // pred_check
        %p1447 = pneg %p1446
      $region94: #{transformer_layer_forward.1} parent=5 // pred_check_branch
        %1449 = sbr.rel (%p1447) target = $region96
      $region95: #{transformer_layer_forward.1} parent=5 // pred_region
        %s1450 = ssub.s32 %s26, 2
        // Predicated region
        $region97: #{transformer_layer_forward.1} parent=95 // pred_check
          %p1451 = pneg %p417
        $region98: #{transformer_layer_forward.1} parent=95 // pred_check_branch
          %1453 = sbr.rel (%p1451) target = $region100
        $region99: #{transformer_layer_forward.1} parent=95 // pred_region
          %s1454 = sand.u32 %s402, 1
          %s1455 = scalar_lea.sflag [#allocation3], %s1454
          %s1456 = sand.u32 %s402, 1
          %s1457 = smul.addr %s1456, 8
          %s1458 = scalar_lea.vmem [#allocation2], %s1457
          %1460 = dma.done %s1455, 128
        $region100: #{transformer_layer_forward.1} parent=95 // pred_fallthru
          _
      $region96: #{transformer_layer_forward.1} parent=5 // pred_fallthru
        _
    $region6: #{transformer_layer_forward.1} parent=1 // loop_footer
      %s30 = sadd.s32 1, %s26
    $region7: #{transformer_layer_forward.1} parent=1 // loop_footer_branch
      %25 = sbr.rel target = $region3
    $region8: #{transformer_layer_forward.1} parent=1 // loop_exit
      _
    %1461 = vsyncpa [#allocation3], 1
    %s1462 = scalar_lea.sflag [#allocation3], 1
    %1463 = vsyncpa %s1462, 1

</llo_original>
